<compile_context>
chip_gen: v7x
topology: tpu7x:2x2x1
jax: 0.10.0
libtpu: 0.0.40
codegen_flags: <defaults>
</compile_context>

<pallas_src>
import math
import functools

import jax
import jax.numpy as jnp
from jax import lax
from jax.experimental import pallas as pl
from jax.experimental.pallas import tpu as pltpu


# ----------------------------- in-kernel helpers -----------------------------

def _layernorm(x, w, b, eps=1e-6):
    # x: (S, D) f32; w, b: (D,) f32
    mu = jnp.mean(x, axis=-1, keepdims=True)
    xc = x - mu
    var = jnp.mean(xc * xc, axis=-1, keepdims=True)
    inv = lax.rsqrt(var + eps)
    return xc * inv * w + b


def _gelu_exact(x):
    # PyTorch nn.GELU() default (erf formulation)
    return 0.5 * x * (1.0 + lax.erf(x * (1.0 / math.sqrt(2.0))))


# ------------------------------- fused kernel --------------------------------

def encoder_stack_kernel(x_ref, pos_ref,
                         ln1w_ref, ln1b_ref,
                         wqkv_ref, bqkv_ref, wo_ref, bo_ref,
                         ln2w_ref, ln2b_ref,
                         w1_ref, b1_ref, w2_ref, b2_ref,
                         lnfw_ref, lnfb_ref,
                         o_ref,
                         x_sc, ctx_sc,
                         *, num_heads):
    """One grid step = (one batch element) x (one encoder layer).

    The f32 residual stream lives in `x_sc` (VMEM scratch) across the whole
    inner L axis; the output is written only on the last layer.
    """
    l = pl.program_id(1)
    n_layers = pl.num_programs(1)

    S = x_ref.shape[1]
    D = x_ref.shape[2]
    H = num_heads
    dh = D // H
    scale = 1.0 / math.sqrt(dh)

    # Layer 0: load activations + positional embedding into the resident
    # residual-stream scratch (stays in VMEM for all L layers of this batch b).
    @pl.when(l == 0)
    def _():
        x_sc[...] = x_ref[0].astype(jnp.float32) + pos_ref[0].astype(jnp.float32)

    x = x_sc[...]                                            # (S, D) f32

    # ---- LN1 (f32 statistics) ----
    y = _layernorm(x, ln1w_ref[0, 0], ln1b_ref[0, 0])
    yb = y.astype(jnp.bfloat16)

    # ---- fused QKV projection: bf16 MXU inputs, f32 accumulation ----
    # wqkv_ref[0] is pre-transposed (D, 3D) bf16; bias (3D,) f32 read once.
    qkv = (jnp.dot(yb, wqkv_ref[0], preferred_element_type=jnp.float32)
           + bqkv_ref[0, 0])                                 # (S, 3D) f32
    qkv_b = qkv.astype(jnp.bfloat16)

    # ---- multi-head self-attention (q = k = v) ----
    # Per-head score/context matmuls (static unroll, H is small); per-head
    # contexts are assembled into ctx_sc so the output projection is a single
    # (S, D) x (D, D) matmul with K = D (full MXU fill).
    for h in range(H):
        qh = qkv_b[:, h * dh:(h + 1) * dh]                   # (S, dh)
        kh = qkv_b[:, D + h * dh:D + (h + 1) * dh]
        vh = qkv_b[:, 2 * D + h * dh:2 * D + (h + 1) * dh]
        s = lax.dot_general(qh, kh, (((1,), (1,)), ((), ())),
                            preferred_element_type=jnp.float32) * scale  # (S, S)
        s = s - jnp.max(s, axis=-1, keepdims=True)
        p = jnp.exp(s)
        p = p * pl.reciprocal(jnp.sum(p, axis=-1, keepdims=True), approx=True)
        ctx_h = jnp.dot(p.astype(jnp.bfloat16), vh,
                        preferred_element_type=jnp.float32)  # (S, dh) f32
        ctx_sc[:, h * dh:(h + 1) * dh] = ctx_h

    # Single fused output projection (wo_ref[0] pre-transposed (D, D) bf16).
    attn = (jnp.dot(ctx_sc[...].astype(jnp.bfloat16), wo_ref[0],
                    preferred_element_type=jnp.float32)
            + bo_ref[0, 0])                                  # (S, D) f32

    # residual 1 (dropout == identity in eval mode)
    x2 = attn + x

    # ---- LN2 + MLP (w1_t: (D, M), w2_t: (M, D), bf16) ----
    y2 = _layernorm(x2, ln2w_ref[0, 0], ln2b_ref[0, 0])
    h1 = (jnp.dot(y2.astype(jnp.bfloat16), w1_ref[0],
                  preferred_element_type=jnp.float32)
          + b1_ref[0, 0])                                    # (S, M) f32
    h1 = _gelu_exact(h1)
    h2 = (jnp.dot(h1.astype(jnp.bfloat16), w2_ref[0],
                  preferred_element_type=jnp.float32)
          + b2_ref[0, 0])                                    # (S, D) f32

    # residual 2 -> carry the residual stream in VMEM to the next layer
    out = x2 + h2
    x_sc[...] = out

    # Final encoder LayerNorm, written to HBM only once per batch element.
    @pl.when(l == n_layers - 1)
    def _():
        o_ref[0] = _layernorm(out, lnfw_ref[0], lnfb_ref[0]).astype(o_ref.dtype)


# ------------------------------- wrapper --------------------------------------

def encoder_forward(x, params, is_video, num_heads):
    B, S, D = x.shape
    pos = params["pos_video"] if is_video else params["pos_image"]
    L = params["wqkv_t"].shape[0]
    M = params["w1_t"].shape[2]

    def rep(shape):
        """Whole (small) array, replicated over the (B, L) grid."""
        return pl.BlockSpec(shape, lambda b, l, _n=len(shape): (0,) * _n)

    def per_layer(shape):
        """One layer's slab of a (L, ...) stacked param, selected by grid axis l."""
        n_rest = len(shape) - 1
        return pl.BlockSpec((1,) + shape[1:],
                            lambda b, l, _n=n_rest: (l,) + (0,) * _n)

    kernel = functools.partial(encoder_stack_kernel, num_heads=num_heads)

    return pl.pallas_call(
        kernel,
        out_shape=jax.ShapeDtypeStruct((B, S, D), x.dtype),
        grid=(B, L),
        in_specs=[
            pl.BlockSpec((1, S, D), lambda b, l: (b, 0, 0)),       # x
            rep((1, S, D)),                                        # pos embedding
            per_layer((L, 1, D)), per_layer((L, 1, D)),            # ln1 w, b
            per_layer((L, D, 3 * D)), per_layer((L, 1, 3 * D)),    # wqkv^T, bqkv
            per_layer((L, D, D)), per_layer((L, 1, D)),            # wo^T, bo
            per_layer((L, 1, D)), per_layer((L, 1, D)),            # ln2 w, b
            per_layer((L, D, M)), per_layer((L, 1, M)),            # w1^T, b1
            per_layer((L, M, D)), per_layer((L, 1, D)),            # w2^T, b2
            rep((1, D)), rep((1, D)),                              # final ln w, b
        ],
        out_specs=pl.BlockSpec((1, S, D), lambda b, l: (b, 0, 0)),
        scratch_shapes=[
            pltpu.VMEM((S, D), jnp.float32),   # resident residual stream
            pltpu.VMEM((S, D), jnp.float32),   # per-layer attention context
        ],
        compiler_params=pltpu.CompilerParams(
            dimension_semantics=("parallel", "arbitrary"),
            vmem_limit_bytes=48 * 1024 * 1024,
        ),
    )(x, pos,
      params["ln1_w"], params["ln1_b"],
      params["wqkv_t"], params["bqkv"], params["wo_t"], params["bo"],
      params["ln2_w"], params["ln2_b"],
      params["w1_t"], params["b1"], params["w2_t"], params["b2"],
      params["ln_w"], params["ln_b"])


# --------------------------- deterministic init --------------------------------

def _xavier_uniform(key, shape):
    fan_out, fan_in = shape
    a = math.sqrt(6.0 / (fan_in + fan_out))
    return jax.random.uniform(key, shape, jnp.float32, -a, a)


def init_params(key, num_layers, seq_img, seq_vid, D, M, weight_dtype=jnp.bfloat16):
    keys = jax.random.split(key, 2 + num_layers)
    params = {
        "pos_image": 0.02 * jax.random.normal(keys[0], (1, seq_img, D), jnp.float32),
        "pos_video": 0.02 * jax.random.normal(keys[1], (1, seq_vid, D), jnp.float32),
        "ln_w": jnp.ones((1, D), jnp.float32),
        "ln_b": jnp.zeros((1, D), jnp.float32),
    }
    wqkv_t, wo_t, w1_t, w2_t, b1, b2 = [], [], [], [], [], []
    for i in range(num_layers):
        k = jax.random.split(keys[2 + i], 6)
        # PyTorch conventions: in_proj (3D, D) xavier, out_proj (D, D) xavier,
        # MLP linears (M, D) / (D, M) xavier with std=1e-6 normal biases.
        wqkv_t.append(_xavier_uniform(k[0], (3 * D, D)).T)   # -> (D, 3D)
        wo_t.append(_xavier_uniform(k[1], (D, D)).T)         # -> (D, D)
        w1_t.append(_xavier_uniform(k[2], (M, D)).T)         # -> (D, M)
        w2_t.append(_xavier_uniform(k[4], (D, M)).T)         # -> (M, D)
        b1.append(1e-6 * jax.random.normal(k[3], (1, M), jnp.float32))
        b2.append(1e-6 * jax.random.normal(k[5], (1, D), jnp.float32))
    L = num_layers
    params.update({
        "ln1_w": jnp.ones((L, 1, D), jnp.float32),
        "ln1_b": jnp.zeros((L, 1, D), jnp.float32),
        "ln2_w": jnp.ones((L, 1, D), jnp.float32),
        "ln2_b": jnp.zeros((L, 1, D), jnp.float32),
        "wqkv_t": jnp.stack(wqkv_t).astype(weight_dtype),    # (L, D, 3D) bf16
        "bqkv": jnp.zeros((L, 1, 3 * D), jnp.float32),       # MHA in_proj bias = 0
        "wo_t": jnp.stack(wo_t).astype(weight_dtype),        # (L, D, D) bf16
        "bo": jnp.zeros((L, 1, D), jnp.float32),             # out_proj bias = 0
        "w1_t": jnp.stack(w1_t).astype(weight_dtype),        # (L, D, M) bf16
        "b1": jnp.stack(b1),                                 # (L, 1, M) f32
        "w2_t": jnp.stack(w2_t).astype(weight_dtype),        # (L, M, D) bf16
        "b2": jnp.stack(b2),                                 # (L, 1, D) f32
    })
    return params


# ------------------------------------ main --------------------------------------

if __name__ == "__main__":
    # small config consistent with the module: seq=8, hidden=32, heads=4, mlp=64
    B, S, D, H, M, L = 2, 8, 32, 4, 64, 2

    key = jax.random.PRNGKey(0)
    kx, kp = jax.random.split(key)
    x = jax.random.normal(kx, (B, S, D), jnp.float32)
    params = init_params(kp, num_layers=L, seq_img=S, seq_vid=S, D=D, M=M)

    out = encoder_forward(x, params, is_video=False, num_heads=H)
    out = jax.block_until_ready(out)
    assert out.shape == (B, S, D) and out.dtype == jnp.float32
    assert bool(jnp.all(jnp.isfinite(out)))
    print("KERNEL_OK")
</pallas_src>

<mosaic_0001>
module attributes {stable_mosaic.version = 11 : i64} {
  func.func @encoder_stack_kernel(%arg0: i32, %arg1: i32, %arg2: memref<1x8x32xf32, #tpu.memory_space<vmem>>, %arg3: memref<1x8x32xf32, #tpu.memory_space<vmem>>, %arg4: memref<1x1x32xf32, #tpu.memory_space<vmem>>, %arg5: memref<1x1x32xf32, #tpu.memory_space<vmem>>, %arg6: memref<1x32x96xbf16, #tpu.memory_space<vmem>>, %arg7: memref<1x1x96xf32, #tpu.memory_space<vmem>>, %arg8: memref<1x32x32xbf16, #tpu.memory_space<vmem>>, %arg9: memref<1x1x32xf32, #tpu.memory_space<vmem>>, %arg10: memref<1x1x32xf32, #tpu.memory_space<vmem>>, %arg11: memref<1x1x32xf32, #tpu.memory_space<vmem>>, %arg12: memref<1x32x64xbf16, #tpu.memory_space<vmem>>, %arg13: memref<1x1x64xf32, #tpu.memory_space<vmem>>, %arg14: memref<1x64x32xbf16, #tpu.memory_space<vmem>>, %arg15: memref<1x1x32xf32, #tpu.memory_space<vmem>>, %arg16: memref<1x32xf32, #tpu.memory_space<vmem>>, %arg17: memref<1x32xf32, #tpu.memory_space<vmem>>, %arg18: memref<1x8x32xf32, #tpu.memory_space<vmem>>, %arg19: memref<8x32xf32, #tpu.memory_space<vmem>>, %arg20: memref<8x32xf32, #tpu.memory_space<vmem>>) attributes {dimension_semantics = [#tpu.dimension_semantics<parallel>, #tpu.dimension_semantics<arbitrary>], iteration_bounds = array<i64: 2, 2>, scalar_prefetch = 0 : i64, scratch_operands = 2 : i64, tpu.core_type = #tpu.core_type<tc>, window_params = [{transform_indices = @transform_0, window_bounds = array<i64: 1, 8, 32>}, {pipeline_mode = #tpu.pipeline_mode<synchronous>, transform_indices = @transform_1, window_bounds = array<i64: 1, 8, 32>}, {transform_indices = @transform_2, window_bounds = array<i64: 1, 1, 32>}, {transform_indices = @transform_3, window_bounds = array<i64: 1, 1, 32>}, {transform_indices = @transform_4, window_bounds = array<i64: 1, 32, 96>}, {transform_indices = @transform_5, window_bounds = array<i64: 1, 1, 96>}, {transform_indices = @transform_6, window_bounds = array<i64: 1, 32, 32>}, {transform_indices = @transform_7, window_bounds = array<i64: 1, 1, 32>}, {transform_indices = @transform_8, window_bounds = array<i64: 1, 1, 32>}, {transform_indices = @transform_9, window_bounds = array<i64: 1, 1, 32>}, {transform_indices = @transform_10, window_bounds = array<i64: 1, 32, 64>}, {transform_indices = @transform_11, window_bounds = array<i64: 1, 1, 64>}, {transform_indices = @transform_12, window_bounds = array<i64: 1, 64, 32>}, {transform_indices = @transform_13, window_bounds = array<i64: 1, 1, 32>}, {pipeline_mode = #tpu.pipeline_mode<synchronous>, transform_indices = @transform_14, window_bounds = array<i64: 1, 32>}, {pipeline_mode = #tpu.pipeline_mode<synchronous>, transform_indices = @transform_15, window_bounds = array<i64: 1, 32>}, {transform_indices = @transform_16, window_bounds = array<i64: 1, 8, 32>}]} {
    %c0_i32 = arith.constant 0 : i32
    %0 = arith.cmpi eq, %arg1, %c0_i32 : i32
    %1 = arith.extui %0 : i1 to i32
    %c0_i32_0 = arith.constant 0 : i32
    %2 = arith.cmpi ne, %1, %c0_i32_0 : i32
    scf.if %2 {
      %c0_84 = arith.constant 0 : index
      %c0_85 = arith.constant 0 : index
      %c0_86 = arith.constant 0 : index
      %184 = vector.load %arg2[%c0_84, %c0_85, %c0_86] : memref<1x8x32xf32, #tpu.memory_space<vmem>>, vector<1x8x32xf32>
      %185 = vector.shape_cast %184 : vector<1x8x32xf32> to vector<8x32xf32>
      %c0_87 = arith.constant 0 : index
      %c0_88 = arith.constant 0 : index
      %c0_89 = arith.constant 0 : index
      %186 = vector.load %arg3[%c0_87, %c0_88, %c0_89] : memref<1x8x32xf32, #tpu.memory_space<vmem>>, vector<1x8x32xf32>
      %187 = vector.shape_cast %186 : vector<1x8x32xf32> to vector<8x32xf32>
      %188 = arith.addf %185, %187 : vector<8x32xf32>
      %c0_90 = arith.constant 0 : index
      %c0_91 = arith.constant 0 : index
      %189 = vector.load %arg19[%c0_90, %c0_91] : memref<8x32xf32, #tpu.memory_space<vmem>>, vector<8x32xf32>
      tpu.vector_store %arg19[%c0_90, %c0_91], %188 {strides = array<i32>} : memref<8x32xf32, #tpu.memory_space<vmem>>, vector<8x32xf32>,
    } else {
    }
    %c0 = arith.constant 0 : index
    %c0_1 = arith.constant 0 : index
    %3 = vector.load %arg19[%c0, %c0_1] : memref<8x32xf32, #tpu.memory_space<vmem>>, vector<8x32xf32>
    %c0_2 = arith.constant 0 : index
    %c0_3 = arith.constant 0 : index
    %c0_4 = arith.constant 0 : index
    %4 = vector.load %arg4[%c0_2, %c0_3, %c0_4] : memref<1x1x32xf32, #tpu.memory_space<vmem>>, vector<1x1x32xf32>
    %5 = vector.shape_cast %4 : vector<1x1x32xf32> to vector<32xf32>
    %c0_5 = arith.constant 0 : index
    %c0_6 = arith.constant 0 : index
    %c0_7 = arith.constant 0 : index
    %6 = vector.load %arg5[%c0_5, %c0_6, %c0_7] : memref<1x1x32xf32, #tpu.memory_space<vmem>>, vector<1x1x32xf32>
    %7 = vector.shape_cast %6 : vector<1x1x32xf32> to vector<32xf32>
    %cst = arith.constant dense<0.000000e+00> : vector<8xf32>
    %8 = vector.multi_reduction <add>, %3, %cst [1] : vector<8x32xf32> to vector<8xf32>
    %9 = vector.shape_cast %8 : vector<8xf32> to vector<8x1xf32>
    %cst_8 = arith.constant 3.200000e+01 : f32
    %10 = vector.broadcast %cst_8 : f32 to vector<8x1xf32>
    %11 = arith.divf %9, %10 : vector<8x1xf32>
    %12 = vector.broadcast %11 : vector<8x1xf32> to vector<8x32xf32>
    %13 = arith.subf %3, %12 : vector<8x32xf32>
    %14 = arith.mulf %13, %13 : vector<8x32xf32>
    %cst_9 = arith.constant dense<0.000000e+00> : vector<8xf32>
    %15 = vector.multi_reduction <add>, %14, %cst_9 [1] : vector<8x32xf32> to vector<8xf32>
    %16 = vector.shape_cast %15 : vector<8xf32> to vector<8x1xf32>
    %cst_10 = arith.constant 3.200000e+01 : f32
    %17 = vector.broadcast %cst_10 : f32 to vector<8x1xf32>
    %18 = arith.divf %16, %17 : vector<8x1xf32>
    %cst_11 = arith.constant 9.99999997E-7 : f32
    %19 = vector.broadcast %cst_11 : f32 to vector<8x1xf32>
    %20 = arith.addf %18, %19 : vector<8x1xf32>
    %21 = math.rsqrt %20 : vector<8x1xf32>
    %22 = vector.broadcast %21 : vector<8x1xf32> to vector<8x32xf32>
    %23 = arith.mulf %13, %22 : vector<8x32xf32>
    %24 = vector.shape_cast %5 : vector<32xf32> to vector<1x32xf32>
    %25 = vector.broadcast %24 : vector<1x32xf32> to vector<8x32xf32>
    %26 = arith.mulf %23, %25 : vector<8x32xf32>
    %27 = vector.shape_cast %7 : vector<32xf32> to vector<1x32xf32>
    %28 = vector.broadcast %27 : vector<1x32xf32> to vector<8x32xf32>
    %29 = arith.addf %26, %28 : vector<8x32xf32>
    %30 = arith.truncf %29 : vector<8x32xf32> to vector<8x32xbf16>
    %c0_12 = arith.constant 0 : index
    %c0_13 = arith.constant 0 : index
    %c0_14 = arith.constant 0 : index
    %31 = vector.load %arg6[%c0_12, %c0_13, %c0_14] : memref<1x32x96xbf16, #tpu.memory_space<vmem>>, vector<1x32x96xbf16>
    %32 = vector.shape_cast %31 : vector<1x32x96xbf16> to vector<32x96xbf16>
    %cst_15 = arith.constant dense<0.000000e+00> : vector<8x96xf32>
    %33 = tpu.matmul %30, %32, %cst_15 {dimension_numbers = #tpu.dot_dimension_numbers<[1], [0], [0], [1], [0, 0, 1, 1], [], []>} : vector<8x32xbf16>, vector<32x96xbf16>, vector<8x96xf32> -> vector<8x96xf32>
    %c0_16 = arith.constant 0 : index
    %c0_17 = arith.constant 0 : index
    %c0_18 = arith.constant 0 : index
    %34 = vector.load %arg7[%c0_16, %c0_17, %c0_18] : memref<1x1x96xf32, #tpu.memory_space<vmem>>, vector<1x1x96xf32>
    %35 = vector.shape_cast %34 : vector<1x1x96xf32> to vector<96xf32>
    %36 = vector.shape_cast %35 : vector<96xf32> to vector<1x96xf32>
    %37 = vector.broadcast %36 : vector<1x96xf32> to vector<8x96xf32>
    %38 = arith.addf %33, %37 : vector<8x96xf32>
    %39 = arith.truncf %38 : vector<8x96xf32> to vector<8x96xbf16>
    %40 = vector.extract_strided_slice %39 {offsets = [0, 0], sizes = [8, 8], strides = [1, 1]} : vector<8x96xbf16> to vector<8x8xbf16>
    %41 = vector.extract_strided_slice %39 {offsets = [0, 32], sizes = [8, 8], strides = [1, 1]} : vector<8x96xbf16> to vector<8x8xbf16>
    %42 = vector.extract_strided_slice %39 {offsets = [0, 64], sizes = [8, 8], strides = [1, 1]} : vector<8x96xbf16> to vector<8x8xbf16>
    %cst_19 = arith.constant dense<0.000000e+00> : vector<8x8xf32>
    %43 = tpu.matmul %40, %41, %cst_19 {dimension_numbers = #tpu.dot_dimension_numbers<[1], [1], [0], [0], [0, 0, 1, 0], [], []>} : vector<8x8xbf16>, vector<8x8xbf16>, vector<8x8xf32> -> vector<8x8xf32>
    %cst_20 = arith.constant 0.353553385 : f32
    %44 = vector.broadcast %cst_20 : f32 to vector<8x8xf32>
    %45 = arith.mulf %43, %44 : vector<8x8xf32>
    %cst_21 = arith.constant dense<0xFF800000> : vector<8xf32>
    %46 = vector.multi_reduction <maximumf>, %45, %cst_21 [1] : vector<8x8xf32> to vector<8xf32>
    %47 = vector.shape_cast %46 : vector<8xf32> to vector<8x1xf32>
    %48 = vector.broadcast %47 : vector<8x1xf32> to vector<8x8xf32>
    %49 = arith.subf %45, %48 : vector<8x8xf32>
    %50 = math.exp %49 : vector<8x8xf32>
    %cst_22 = arith.constant dense<0.000000e+00> : vector<8xf32>
    %51 = vector.multi_reduction <add>, %50, %cst_22 [1] : vector<8x8xf32> to vector<8xf32>
    %52 = vector.shape_cast %51 : vector<8xf32> to vector<8x1xf32>
    %53 = tpu.reciprocal %52 {approx = true} : vector<8x1xf32> -> vector<8x1xf32>
    %54 = vector.broadcast %53 : vector<8x1xf32> to vector<8x8xf32>
    %55 = arith.mulf %50, %54 : vector<8x8xf32>
    %56 = arith.truncf %55 : vector<8x8xf32> to vector<8x8xbf16>
    %cst_23 = arith.constant dense<0.000000e+00> : vector<8x8xf32>
    %57 = tpu.matmul %56, %42, %cst_23 {dimension_numbers = #tpu.dot_dimension_numbers<[1], [0], [0], [1], [0, 0, 1, 1], [], []>} : vector<8x8xbf16>, vector<8x8xbf16>, vector<8x8xf32> -> vector<8x8xf32>
    %c0_24 = arith.constant 0 : index
    %c0_25 = arith.constant 0 : index
    %58 = vector.load %arg20[%c0_24, %c0_25] : memref<8x32xf32, #tpu.memory_space<vmem>>, vector<8x8xf32>
    tpu.vector_store %arg20[%c0_24, %c0_25], %57 {strides = array<i32>} : memref<8x32xf32, #tpu.memory_space<vmem>>, vector<8x8xf32>,
    %59 = vector.extract_strided_slice %39 {offsets = [0, 8], sizes = [8, 8], strides = [1, 1]} : vector<8x96xbf16> to vector<8x8xbf16>
    %60 = vector.extract_strided_slice %39 {offsets = [0, 40], sizes = [8, 8], strides = [1, 1]} : vector<8x96xbf16> to vector<8x8xbf16>
    %61 = vector.extract_strided_slice %39 {offsets = [0, 72], sizes = [8, 8], strides = [1, 1]} : vector<8x96xbf16> to vector<8x8xbf16>
    %cst_26 = arith.constant dense<0.000000e+00> : vector<8x8xf32>
    %62 = tpu.matmul %59, %60, %cst_26 {dimension_numbers = #tpu.dot_dimension_numbers<[1], [1], [0], [0], [0, 0, 1, 0], [], []>} : vector<8x8xbf16>, vector<8x8xbf16>, vector<8x8xf32> -> vector<8x8xf32>
    %cst_27 = arith.constant 0.353553385 : f32
    %63 = vector.broadcast %cst_27 : f32 to vector<8x8xf32>
    %64 = arith.mulf %62, %63 : vector<8x8xf32>
    %cst_28 = arith.constant dense<0xFF800000> : vector<8xf32>
    %65 = vector.multi_reduction <maximumf>, %64, %cst_28 [1] : vector<8x8xf32> to vector<8xf32>
    %66 = vector.shape_cast %65 : vector<8xf32> to vector<8x1xf32>
    %67 = vector.broadcast %66 : vector<8x1xf32> to vector<8x8xf32>
    %68 = arith.subf %64, %67 : vector<8x8xf32>
    %69 = math.exp %68 : vector<8x8xf32>
    %cst_29 = arith.constant dense<0.000000e+00> : vector<8xf32>
    %70 = vector.multi_reduction <add>, %69, %cst_29 [1] : vector<8x8xf32> to vector<8xf32>
    %71 = vector.shape_cast %70 : vector<8xf32> to vector<8x1xf32>
    %72 = tpu.reciprocal %71 {approx = true} : vector<8x1xf32> -> vector<8x1xf32>
    %73 = vector.broadcast %72 : vector<8x1xf32> to vector<8x8xf32>
    %74 = arith.mulf %69, %73 : vector<8x8xf32>
    %75 = arith.truncf %74 : vector<8x8xf32> to vector<8x8xbf16>
    %cst_30 = arith.constant dense<0.000000e+00> : vector<8x8xf32>
    %76 = tpu.matmul %75, %61, %cst_30 {dimension_numbers = #tpu.dot_dimension_numbers<[1], [0], [0], [1], [0, 0, 1, 1], [], []>} : vector<8x8xbf16>, vector<8x8xbf16>, vector<8x8xf32> -> vector<8x8xf32>
    %c0_31 = arith.constant 0 : index
    %c8 = arith.constant 8 : index
    %77 = vector.load %arg20[%c0_31, %c8] : memref<8x32xf32, #tpu.memory_space<vmem>>, vector<8x8xf32>
    tpu.vector_store %arg20[%c0_31, %c8], %76 {strides = array<i32>} : memref<8x32xf32, #tpu.memory_space<vmem>>, vector<8x8xf32>,
    %78 = vector.extract_strided_slice %39 {offsets = [0, 16], sizes = [8, 8], strides = [1, 1]} : vector<8x96xbf16> to vector<8x8xbf16>
    %79 = vector.extract_strided_slice %39 {offsets = [0, 48], sizes = [8, 8], strides = [1, 1]} : vector<8x96xbf16> to vector<8x8xbf16>
    %80 = vector.extract_strided_slice %39 {offsets = [0, 80], sizes = [8, 8], strides = [1, 1]} : vector<8x96xbf16> to vector<8x8xbf16>
    %cst_32 = arith.constant dense<0.000000e+00> : vector<8x8xf32>
    %81 = tpu.matmul %78, %79, %cst_32 {dimension_numbers = #tpu.dot_dimension_numbers<[1], [1], [0], [0], [0, 0, 1, 0], [], []>} : vector<8x8xbf16>, vector<8x8xbf16>, vector<8x8xf32> -> vector<8x8xf32>
    %cst_33 = arith.constant 0.353553385 : f32
    %82 = vector.broadcast %cst_33 : f32 to vector<8x8xf32>
    %83 = arith.mulf %81, %82 : vector<8x8xf32>
    %cst_34 = arith.constant dense<0xFF800000> : vector<8xf32>
    %84 = vector.multi_reduction <maximumf>, %83, %cst_34 [1] : vector<8x8xf32> to vector<8xf32>
    %85 = vector.shape_cast %84 : vector<8xf32> to vector<8x1xf32>
    %86 = vector.broadcast %85 : vector<8x1xf32> to vector<8x8xf32>
    %87 = arith.subf %83, %86 : vector<8x8xf32>
    %88 = math.exp %87 : vector<8x8xf32>
    %cst_35 = arith.constant dense<0.000000e+00> : vector<8xf32>
    %89 = vector.multi_reduction <add>, %88, %cst_35 [1] : vector<8x8xf32> to vector<8xf32>
    %90 = vector.shape_cast %89 : vector<8xf32> to vector<8x1xf32>
    %91 = tpu.reciprocal %90 {approx = true} : vector<8x1xf32> -> vector<8x1xf32>
    %92 = vector.broadcast %91 : vector<8x1xf32> to vector<8x8xf32>
    %93 = arith.mulf %88, %92 : vector<8x8xf32>
    %94 = arith.truncf %93 : vector<8x8xf32> to vector<8x8xbf16>
    %cst_36 = arith.constant dense<0.000000e+00> : vector<8x8xf32>
    %95 = tpu.matmul %94, %80, %cst_36 {dimension_numbers = #tpu.dot_dimension_numbers<[1], [0], [0], [1], [0, 0, 1, 1], [], []>} : vector<8x8xbf16>, vector<8x8xbf16>, vector<8x8xf32> -> vector<8x8xf32>
    %c0_37 = arith.constant 0 : index
    %c16 = arith.constant 16 : index
    %96 = vector.load %arg20[%c0_37, %c16] : memref<8x32xf32, #tpu.memory_space<vmem>>, vector<8x8xf32>
    tpu.vector_store %arg20[%c0_37, %c16], %95 {strides = array<i32>} : memref<8x32xf32, #tpu.memory_space<vmem>>, vector<8x8xf32>,
    %97 = vector.extract_strided_slice %39 {offsets = [0, 24], sizes = [8, 8], strides = [1, 1]} : vector<8x96xbf16> to vector<8x8xbf16>
    %98 = vector.extract_strided_slice %39 {offsets = [0, 56], sizes = [8, 8], strides = [1, 1]} : vector<8x96xbf16> to vector<8x8xbf16>
    %99 = vector.extract_strided_slice %39 {offsets = [0, 88], sizes = [8, 8], strides = [1, 1]} : vector<8x96xbf16> to vector<8x8xbf16>
    %cst_38 = arith.constant dense<0.000000e+00> : vector<8x8xf32>
    %100 = tpu.matmul %97, %98, %cst_38 {dimension_numbers = #tpu.dot_dimension_numbers<[1], [1], [0], [0], [0, 0, 1, 0], [], []>} : vector<8x8xbf16>, vector<8x8xbf16>, vector<8x8xf32> -> vector<8x8xf32>
    %cst_39 = arith.constant 0.353553385 : f32
    %101 = vector.broadcast %cst_39 : f32 to vector<8x8xf32>
    %102 = arith.mulf %100, %101 : vector<8x8xf32>
    %cst_40 = arith.constant dense<0xFF800000> : vector<8xf32>
    %103 = vector.multi_reduction <maximumf>, %102, %cst_40 [1] : vector<8x8xf32> to vector<8xf32>
    %104 = vector.shape_cast %103 : vector<8xf32> to vector<8x1xf32>
    %105 = vector.broadcast %104 : vector<8x1xf32> to vector<8x8xf32>
    %106 = arith.subf %102, %105 : vector<8x8xf32>
    %107 = math.exp %106 : vector<8x8xf32>
    %cst_41 = arith.constant dense<0.000000e+00> : vector<8xf32>
    %108 = vector.multi_reduction <add>, %107, %cst_41 [1] : vector<8x8xf32> to vector<8xf32>
    %109 = vector.shape_cast %108 : vector<8xf32> to vector<8x1xf32>
    %110 = tpu.reciprocal %109 {approx = true} : vector<8x1xf32> -> vector<8x1xf32>
    %111 = vector.broadcast %110 : vector<8x1xf32> to vector<8x8xf32>
    %112 = arith.mulf %107, %111 : vector<8x8xf32>
    %113 = arith.truncf %112 : vector<8x8xf32> to vector<8x8xbf16>
    %cst_42 = arith.constant dense<0.000000e+00> : vector<8x8xf32>
    %114 = tpu.matmul %113, %99, %cst_42 {dimension_numbers = #tpu.dot_dimension_numbers<[1], [0], [0], [1], [0, 0, 1, 1], [], []>} : vector<8x8xbf16>, vector<8x8xbf16>, vector<8x8xf32> -> vector<8x8xf32>
    %c0_43 = arith.constant 0 : index
    %c24 = arith.constant 24 : index
    %115 = vector.load %arg20[%c0_43, %c24] : memref<8x32xf32, #tpu.memory_space<vmem>>, vector<8x8xf32>
    tpu.vector_store %arg20[%c0_43, %c24], %114 {strides = array<i32>} : memref<8x32xf32, #tpu.memory_space<vmem>>, vector<8x8xf32>,
    %c0_44 = arith.constant 0 : index
    %c0_45 = arith.constant 0 : index
    %116 = vector.load %arg20[%c0_44, %c0_45] : memref<8x32xf32, #tpu.memory_space<vmem>>, vector<8x32xf32>
    %117 = arith.truncf %116 : vector<8x32xf32> to vector<8x32xbf16>
    %c0_46 = arith.constant 0 : index
    %c0_47 = arith.constant 0 : index
    %c0_48 = arith.constant 0 : index
    %118 = vector.load %arg8[%c0_46, %c0_47, %c0_48] : memref<1x32x32xbf16, #tpu.memory_space<vmem>>, vector<1x32x32xbf16>
    %119 = vector.shape_cast %118 : vector<1x32x32xbf16> to vector<32x32xbf16>
    %cst_49 = arith.constant dense<0.000000e+00> : vector<8x32xf32>
    %120 = tpu.matmul %117, %119, %cst_49 {dimension_numbers = #tpu.dot_dimension_numbers<[1], [0], [0], [1], [0, 0, 1, 1], [], []>} : vector<8x32xbf16>, vector<32x32xbf16>, vector<8x32xf32> -> vector<8x32xf32>
    %c0_50 = arith.constant 0 : index
    %c0_51 = arith.constant 0 : index
    %c0_52 = arith.constant 0 : index
    %121 = vector.load %arg9[%c0_50, %c0_51, %c0_52] : memref<1x1x32xf32, #tpu.memory_space<vmem>>, vector<1x1x32xf32>
    %122 = vector.shape_cast %121 : vector<1x1x32xf32> to vector<32xf32>
    %123 = vector.shape_cast %122 : vector<32xf32> to vector<1x32xf32>
    %124 = vector.broadcast %123 : vector<1x32xf32> to vector<8x32xf32>
    %125 = arith.addf %120, %124 : vector<8x32xf32>
    %126 = arith.addf %125, %3 : vector<8x32xf32>
    %c0_53 = arith.constant 0 : index
    %c0_54 = arith.constant 0 : index
    %c0_55 = arith.constant 0 : index
    %127 = vector.load %arg10[%c0_53, %c0_54, %c0_55] : memref<1x1x32xf32, #tpu.memory_space<vmem>>, vector<1x1x32xf32>
    %128 = vector.shape_cast %127 : vector<1x1x32xf32> to vector<32xf32>
    %c0_56 = arith.constant 0 : index
    %c0_57 = arith.constant 0 : index
    %c0_58 = arith.constant 0 : index
    %129 = vector.load %arg11[%c0_56, %c0_57, %c0_58] : memref<1x1x32xf32, #tpu.memory_space<vmem>>, vector<1x1x32xf32>
    %130 = vector.shape_cast %129 : vector<1x1x32xf32> to vector<32xf32>
    %cst_59 = arith.constant dense<0.000000e+00> : vector<8xf32>
    %131 = vector.multi_reduction <add>, %126, %cst_59 [1] : vector<8x32xf32> to vector<8xf32>
    %132 = vector.shape_cast %131 : vector<8xf32> to vector<8x1xf32>
    %cst_60 = arith.constant 3.200000e+01 : f32
    %133 = vector.broadcast %cst_60 : f32 to vector<8x1xf32>
    %134 = arith.divf %132, %133 : vector<8x1xf32>
    %135 = vector.broadcast %134 : vector<8x1xf32> to vector<8x32xf32>
    %136 = arith.subf %126, %135 : vector<8x32xf32>
    %137 = arith.mulf %136, %136 : vector<8x32xf32>
    %cst_61 = arith.constant dense<0.000000e+00> : vector<8xf32>
    %138 = vector.multi_reduction <add>, %137, %cst_61 [1] : vector<8x32xf32> to vector<8xf32>
    %139 = vector.shape_cast %138 : vector<8xf32> to vector<8x1xf32>
    %cst_62 = arith.constant 3.200000e+01 : f32
    %140 = vector.broadcast %cst_62 : f32 to vector<8x1xf32>
    %141 = arith.divf %139, %140 : vector<8x1xf32>
    %cst_63 = arith.constant 9.99999997E-7 : f32
    %142 = vector.broadcast %cst_63 : f32 to vector<8x1xf32>
    %143 = arith.addf %141, %142 : vector<8x1xf32>
    %144 = math.rsqrt %143 : vector<8x1xf32>
    %145 = vector.broadcast %144 : vector<8x1xf32> to vector<8x32xf32>
    %146 = arith.mulf %136, %145 : vector<8x32xf32>
    %147 = vector.shape_cast %128 : vector<32xf32> to vector<1x32xf32>
    %148 = vector.broadcast %147 : vector<1x32xf32> to vector<8x32xf32>
    %149 = arith.mulf %146, %148 : vector<8x32xf32>
    %150 = vector.shape_cast %130 : vector<32xf32> to vector<1x32xf32>
    %151 = vector.broadcast %150 : vector<1x32xf32> to vector<8x32xf32>
    %152 = arith.addf %149, %151 : vector<8x32xf32>
    %153 = arith.truncf %152 : vector<8x32xf32> to vector<8x32xbf16>
    %c0_64 = arith.constant 0 : index
    %c0_65 = arith.constant 0 : index
    %c0_66 = arith.constant 0 : index
    %154 = vector.load %arg12[%c0_64, %c0_65, %c0_66] : memref<1x32x64xbf16, #tpu.memory_space<vmem>>, vector<1x32x64xbf16>
    %155 = vector.shape_cast %154 : vector<1x32x64xbf16> to vector<32x64xbf16>
    %cst_67 = arith.constant dense<0.000000e+00> : vector<8x64xf32>
    %156 = tpu.matmul %153, %155, %cst_67 {dimension_numbers = #tpu.dot_dimension_numbers<[1], [0], [0], [1], [0, 0, 1, 1], [], []>} : vector<8x32xbf16>, vector<32x64xbf16>, vector<8x64xf32> -> vector<8x64xf32>
    %c0_68 = arith.constant 0 : index
    %c0_69 = arith.constant 0 : index
    %c0_70 = arith.constant 0 : index
    %157 = vector.load %arg13[%c0_68, %c0_69, %c0_70] : memref<1x1x64xf32, #tpu.memory_space<vmem>>, vector<1x1x64xf32>
    %158 = vector.shape_cast %157 : vector<1x1x64xf32> to vector<64xf32>
    %159 = vector.shape_cast %158 : vector<64xf32> to vector<1x64xf32>
    %160 = vector.broadcast %159 : vector<1x64xf32> to vector<8x64xf32>
    %161 = arith.addf %156, %160 : vector<8x64xf32>
    %cst_71 = arith.constant 5.000000e-01 : f32
    %162 = vector.broadcast %cst_71 : f32 to vector<8x64xf32>
    %163 = arith.mulf %162, %161 : vector<8x64xf32>
    %cst_72 = arith.constant 0.707106769 : f32
    %164 = vector.broadcast %cst_72 : f32 to vector<8x64xf32>
    %165 = arith.mulf %161, %164 : vector<8x64xf32>
    %166 = math.erf %165 : vector<8x64xf32>
    %cst_73 = arith.constant 1.000000e+00 : f32
    %167 = vector.broadcast %cst_73 : f32 to vector<8x64xf32>
    %168 = arith.addf %167, %166 : vector<8x64xf32>
    %169 = arith.mulf %163, %168 : vector<8x64xf32>
    %170 = arith.truncf %169 : vector<8x64xf32> to vector<8x64xbf16>
    %c0_74 = arith.constant 0 : index
    %c0_75 = arith.constant 0 : index
    %c0_76 = arith.constant 0 : index
    %171 = vector.load %arg14[%c0_74, %c0_75, %c0_76] : memref<1x64x32xbf16, #tpu.memory_space<vmem>>, vector<1x64x32xbf16>
    %172 = vector.shape_cast %171 : vector<1x64x32xbf16> to vector<64x32xbf16>
    %cst_77 = arith.constant dense<0.000000e+00> : vector<8x32xf32>
    %173 = tpu.matmul %170, %172, %cst_77 {dimension_numbers = #tpu.dot_dimension_numbers<[1], [0], [0], [1], [0, 0, 1, 1], [], []>} : vector<8x64xbf16>, vector<64x32xbf16>, vector<8x32xf32> -> vector<8x32xf32>
    %c0_78 = arith.constant 0 : index
    %c0_79 = arith.constant 0 : index
    %c0_80 = arith.constant 0 : index
    %174 = vector.load %arg15[%c0_78, %c0_79, %c0_80] : memref<1x1x32xf32, #tpu.memory_space<vmem>>, vector<1x1x32xf32>
    %175 = vector.shape_cast %174 : vector<1x1x32xf32> to vector<32xf32>
    %176 = vector.shape_cast %175 : vector<32xf32> to vector<1x32xf32>
    %177 = vector.broadcast %176 : vector<1x32xf32> to vector<8x32xf32>
    %178 = arith.addf %173, %177 : vector<8x32xf32>
    %179 = arith.addf %126, %178 : vector<8x32xf32>
    %c0_81 = arith.constant 0 : index
    %c0_82 = arith.constant 0 : index
    %180 = vector.load %arg19[%c0_81, %c0_82] : memref<8x32xf32, #tpu.memory_space<vmem>>, vector<8x32xf32>
    tpu.vector_store %arg19[%c0_81, %c0_82], %179 {strides = array<i32>} : memref<8x32xf32, #tpu.memory_space<vmem>>, vector<8x32xf32>,
    %c1_i32 = arith.constant 1 : i32
    %181 = arith.cmpi eq, %arg1, %c1_i32 : i32
    %182 = arith.extui %181 : i1 to i32
    %c0_i32_83 = arith.constant 0 : i32
    %183 = arith.cmpi ne, %182, %c0_i32_83 : i32
    scf.if %183 {
      %c0_84 = arith.constant 0 : index
      %c0_85 = arith.constant 0 : index
      %184 = vector.load %arg16[%c0_84, %c0_85] : memref<1x32xf32, #tpu.memory_space<vmem>>, vector<1x32xf32>
      %185 = vector.shape_cast %184 : vector<1x32xf32> to vector<32xf32>
      %c0_86 = arith.constant 0 : index
      %c0_87 = arith.constant 0 : index
      %186 = vector.load %arg17[%c0_86, %c0_87] : memref<1x32xf32, #tpu.memory_space<vmem>>, vector<1x32xf32>
      %187 = vector.shape_cast %186 : vector<1x32xf32> to vector<32xf32>
      %cst_88 = arith.constant dense<0.000000e+00> : vector<8xf32>
      %188 = vector.multi_reduction <add>, %179, %cst_88 [1] : vector<8x32xf32> to vector<8xf32>
      %189 = vector.shape_cast %188 : vector<8xf32> to vector<8x1xf32>
      %cst_89 = arith.constant 3.200000e+01 : f32
      %190 = vector.broadcast %cst_89 : f32 to vector<8x1xf32>
      %191 = arith.divf %189, %190 : vector<8x1xf32>
      %192 = vector.broadcast %191 : vector<8x1xf32> to vector<8x32xf32>
      %193 = arith.subf %179, %192 : vector<8x32xf32>
      %194 = arith.mulf %193, %193 : vector<8x32xf32>
      %cst_90 = arith.constant dense<0.000000e+00> : vector<8xf32>
      %195 = vector.multi_reduction <add>, %194, %cst_90 [1] : vector<8x32xf32> to vector<8xf32>
      %196 = vector.shape_cast %195 : vector<8xf32> to vector<8x1xf32>
      %cst_91 = arith.constant 3.200000e+01 : f32
      %197 = vector.broadcast %cst_91 : f32 to vector<8x1xf32>
      %198 = arith.divf %196, %197 : vector<8x1xf32>
      %cst_92 = arith.constant 9.99999997E-7 : f32
      %199 = vector.broadcast %cst_92 : f32 to vector<8x1xf32>
      %200 = arith.addf %198, %199 : vector<8x1xf32>
      %201 = math.rsqrt %200 : vector<8x1xf32>
      %202 = vector.broadcast %201 : vector<8x1xf32> to vector<8x32xf32>
      %203 = arith.mulf %193, %202 : vector<8x32xf32>
      %204 = vector.shape_cast %185 : vector<32xf32> to vector<1x32xf32>
      %205 = vector.broadcast %204 : vector<1x32xf32> to vector<8x32xf32>
      %206 = arith.mulf %203, %205 : vector<8x32xf32>
      %207 = vector.shape_cast %187 : vector<32xf32> to vector<1x32xf32>
      %208 = vector.broadcast %207 : vector<1x32xf32> to vector<8x32xf32>
      %209 = arith.addf %206, %208 : vector<8x32xf32>
      %c0_93 = arith.constant 0 : index
      %c0_94 = arith.constant 0 : index
      %c0_95 = arith.constant 0 : index
      %210 = vector.load %arg18[%c0_93, %c0_94, %c0_95] : memref<1x8x32xf32, #tpu.memory_space<vmem>>, vector<1x8x32xf32>
      %211 = vector.shape_cast %210 : vector<1x8x32xf32> to vector<8x32xf32>
      %212 = vector.shape_cast %209 : vector<8x32xf32> to vector<1x8x32xf32>
      tpu.vector_store %arg18[%c0_93, %c0_94, %c0_95], %212 {strides = array<i32>} : memref<1x8x32xf32, #tpu.memory_space<vmem>>, vector<1x8x32xf32>,
    } else {
    }
    return
  }
  func.func @transform_0(%arg0: i32, %arg1: i32) -> (i32, i32, i32) {
    %c0_i32 = arith.constant 0 : i32
    %c0_i32_0 = arith.constant 0 : i32
    %c0_i32_1 = arith.constant 0 : i32
    return %arg0, %c0_i32, %c0_i32_0 : i32, i32, i32
  }
  func.func @transform_1(%arg0: i32, %arg1: i32) -> (i32, i32, i32) {
    %c0_i32 = arith.constant 0 : i32
    %c0_i32_0 = arith.constant 0 : i32
    %c0_i32_1 = arith.constant 0 : i32
    %c0_i32_2 = arith.constant 0 : i32
    return %c0_i32, %c0_i32_0, %c0_i32_1 : i32, i32, i32
  }
  func.func @transform_2(%arg0: i32, %arg1: i32) -> (i32, i32, i32) {
    %c0_i32 = arith.constant 0 : i32
    %c0_i32_0 = arith.constant 0 : i32
    %c0_i32_1 = arith.constant 0 : i32
    return %arg1, %c0_i32, %c0_i32_0 : i32, i32, i32
  }
  func.func @transform_3(%arg0: i32, %arg1: i32) -> (i32, i32, i32) {
    %c0_i32 = arith.constant 0 : i32
    %c0_i32_0 = arith.constant 0 : i32
    %c0_i32_1 = arith.constant 0 : i32
    return %arg1, %c0_i32, %c0_i32_0 : i32, i32, i32
  }
  func.func @transform_4(%arg0: i32, %arg1: i32) -> (i32, i32, i32) {
    %c0_i32 = arith.constant 0 : i32
    %c0_i32_0 = arith.constant 0 : i32
    %c0_i32_1 = arith.constant 0 : i32
    return %arg1, %c0_i32, %c0_i32_0 : i32, i32, i32
  }
  func.func @transform_5(%arg0: i32, %arg1: i32) -> (i32, i32, i32) {
    %c0_i32 = arith.constant 0 : i32
    %c0_i32_0 = arith.constant 0 : i32
    %c0_i32_1 = arith.constant 0 : i32
    return %arg1, %c0_i32, %c0_i32_0 : i32, i32, i32
  }
  func.func @transform_6(%arg0: i32, %arg1: i32) -> (i32, i32, i32) {
    %c0_i32 = arith.constant 0 : i32
    %c0_i32_0 = arith.constant 0 : i32
    %c0_i32_1 = arith.constant 0 : i32
    return %arg1, %c0_i32, %c0_i32_0 : i32, i32, i32
  }
  func.func @transform_7(%arg0: i32, %arg1: i32) -> (i32, i32, i32) {
    %c0_i32 = arith.constant 0 : i32
    %c0_i32_0 = arith.constant 0 : i32
    %c0_i32_1 = arith.constant 0 : i32
    return %arg1, %c0_i32, %c0_i32_0 : i32, i32, i32
  }
  func.func @transform_8(%arg0: i32, %arg1: i32) -> (i32, i32, i32) {
    %c0_i32 = arith.constant 0 : i32
    %c0_i32_0 = arith.constant 0 : i32
    %c0_i32_1 = arith.constant 0 : i32
    return %arg1, %c0_i32, %c0_i32_0 : i32, i32, i32
  }
  func.func @transform_9(%arg0: i32, %arg1: i32) -> (i32, i32, i32) {
    %c0_i32 = arith.constant 0 : i32
    %c0_i32_0 = arith.constant 0 : i32
    %c0_i32_1 = arith.constant 0 : i32
    return %arg1, %c0_i32, %c0_i32_0 : i32, i32, i32
  }
  func.func @transform_10(%arg0: i32, %arg1: i32) -> (i32, i32, i32) {
    %c0_i32 = arith.constant 0 : i32
    %c0_i32_0 = arith.constant 0 : i32
    %c0_i32_1 = arith.constant 0 : i32
    return %arg1, %c0_i32, %c0_i32_0 : i32, i32, i32
  }
  func.func @transform_11(%arg0: i32, %arg1: i32) -> (i32, i32, i32) {
    %c0_i32 = arith.constant 0 : i32
    %c0_i32_0 = arith.constant 0 : i32
    %c0_i32_1 = arith.constant 0 : i32
    return %arg1, %c0_i32, %c0_i32_0 : i32, i32, i32
  }
  func.func @transform_12(%arg0: i32, %arg1: i32) -> (i32, i32, i32) {
    %c0_i32 = arith.constant 0 : i32
    %c0_i32_0 = arith.constant 0 : i32
    %c0_i32_1 = arith.constant 0 : i32
    return %arg1, %c0_i32, %c0_i32_0 : i32, i32, i32
  }
  func.func @transform_13(%arg0: i32, %arg1: i32) -> (i32, i32, i32) {
    %c0_i32 = arith.constant 0 : i32
    %c0_i32_0 = arith.constant 0 : i32
    %c0_i32_1 = arith.constant 0 : i32
    return %arg1, %c0_i32, %c0_i32_0 : i32, i32, i32
  }
  func.func @transform_14(%arg0: i32, %arg1: i32) -> (i32, i32) {
    %c0_i32 = arith.constant 0 : i32
    %c0_i32_0 = arith.constant 0 : i32
    %c0_i32_1 = arith.constant 0 : i32
    return %c0_i32, %c0_i32_0 : i32, i32
  }
  func.func @transform_15(%arg0: i32, %arg1: i32) -> (i32, i32) {
    %c0_i32 = arith.constant 0 : i32
    %c0_i32_0 = arith.constant 0 : i32
    %c0_i32_1 = arith.constant 0 : i32
    return %c0_i32, %c0_i32_0 : i32, i32
  }
  func.func @transform_16(%arg0: i32, %arg1: i32) -> (i32, i32, i32) {
    %c0_i32 = arith.constant 0 : i32
    %c0_i32_0 = arith.constant 0 : i32
    %c0_i32_1 = arith.constant 0 : i32
    return %arg0, %c0_i32, %c0_i32_0 : i32, i32, i32
  }
}

</mosaic_0001>

<llo_original>
// kernel: tpu_custom_call.1
$region0: #{tpu_custom_call.1}
  #allocation0 [shape = 'u32[]', space=smem, size = 0x4, offset = 0x4, fixed_abs, tag = 'smem constant byte address 0x4 - core index']
  #allocation1 [shape = 'u32[144,128]{1,0:T(1,128)}', space=vmem, size = 0x12000, scoped, tag = 'internal scratch']
  #allocation2 [shape = 'f32[8,32]{1,0:T(8,128)}', space=vmem, size = 0x1000, scoped, tag = 'scratch operand']
  #allocation3 [shape = 'f32[8,32]{1,0:T(8,128)}', space=vmem, size = 0x1000, scoped, tag = 'scratch operand']
  %s0 = inlined_call_operand.hbm [shape: f32[2,8,32], index: 0, kind: input, shape index: {}]
  %s1 = inlined_call_operand.hbm [shape: f32[1,8,32], index: 1, kind: input, shape index: {}]
  %s2 = inlined_call_operand.vmem [shape: f32[2,1,32], index: 2, kind: input, shape index: {}]
  %s3 = inlined_call_operand.vmem [shape: f32[2,1,32], index: 3, kind: input, shape index: {}]
  %s4 = inlined_call_operand.vmem [shape: bf16[2,32,96], index: 4, kind: input, shape index: {}]
  %s5 = inlined_call_operand.vmem [shape: f32[2,1,96], index: 5, kind: input, shape index: {}]
  %s6 = inlined_call_operand.vmem [shape: bf16[2,32,32], index: 6, kind: input, shape index: {}]
  %s7 = inlined_call_operand.vmem [shape: f32[2,1,32], index: 7, kind: input, shape index: {}]
  %s8 = inlined_call_operand.vmem [shape: f32[2,1,32], index: 8, kind: input, shape index: {}]
  %s9 = inlined_call_operand.vmem [shape: f32[2,1,32], index: 9, kind: input, shape index: {}]
  %s10 = inlined_call_operand.vmem [shape: bf16[2,32,64], index: 10, kind: input, shape index: {}]
  %s11 = inlined_call_operand.hbm [shape: f32[2,1,64], index: 11, kind: input, shape index: {}]
  %s12 = inlined_call_operand.vmem [shape: bf16[2,64,32], index: 12, kind: input, shape index: {}]
  %s13 = inlined_call_operand.vmem [shape: f32[2,1,32], index: 13, kind: input, shape index: {}]
  %s14 = inlined_call_operand.vmem [shape: f32[1,32], index: 14, kind: input, shape index: {}]
  %s15 = inlined_call_operand.vmem [shape: f32[1,32], index: 15, kind: input, shape index: {}]
  %s16 = inlined_call_operand.hbm [shape: f32[2,8,32], index: 16, kind: output, shape index: {}]
  %s17 = sld [smem:[#allocation0]]
  $region117: #{tpu_custom_call.1} parent=0
    _
  %s19 = ssub.s32 1, %s17
  %s20 = scalar_select 0, %s19, %s17
  $region1: #{tpu_custom_call.1} parent=0
    #allocation4 [shape = 'u8[8192]{0}', space=vmem, size = 0x2000, scoped, tag = 'input window, operand 0']
    #allocation5 [shape = 's32[2]{0}', space=sflag, size = 0x8, scoped, tag = 'scoped memory for tpu_custom_call.1']
    #allocation6 [shape = 's32[2]{0}', space=sflag, size = 0x8, scoped, tag = 'scoped memory for tpu_custom_call.1']
    #allocation7 [shape = 'u8[4096]{0}', space=vmem, size = 0x1000, scoped, tag = 'input window, operand 1, single buffered']
    #allocation8 [shape = 's32[1]{0}', space=sflag, size = 0x4, scoped, tag = 'scoped memory for tpu_custom_call.1']
    #allocation9 [shape = 'u8[1024]{0}', space=vmem, size = 0x400, scoped, tag = 'input window, operand 11']
    #allocation10 [shape = 'u8[8192]{0}', space=vmem, size = 0x2000, scoped, tag = 'output window, operand 0']
    %21 = vsyncpa [#allocation5], 0
    %s22 = scalar_lea.sflag [#allocation5], 1
    %23 = vsyncpa %s22, 0
    %24 = vsyncpa [#allocation8], 0
    %25 = vsyncpa [#allocation6], 0
    %s26 = scalar_lea.sflag [#allocation6], 1
    %27 = vsyncpa %s26, 0
    loop: start=0, step=1, limit=6
    $region2: #{tpu_custom_call.1} parent=1 // loop_pre_header
      _
    $region3: #{tpu_custom_call.1} parent=1 // loop_header
      %s29 = sphi 0, %s33
      %p30 = scmp.ge.s32.totalorder %s29, 6
      %s36 = sphi 0, %s48
      %s37 = sphi 0, %s44
      %s38 = sphi 0, %s36
      %s39 = sphi 0, %s37
      %s40 = sphi 0, %s38
      %s41 = sphi 0, %s39
      %s51 = sphi 0, %s53
      %s54 = sphi 0, %s51
      %s55 = sphi 0, %s54
      %s71 = sphi 0, %s55
      %s75 = sphi 0, %s75
      %s77 = sphi 0, %s75
      %s78 = sphi 0, %s77
      %s92 = sphi 0, %s78
      %s98 = sphi 0, %s100
      %s101 = sphi 0, %s98
      %s102 = sphi 0, %s101
      %s118 = sphi 0, %s102
      %s124 = sphi 0, %s126
      %s127 = sphi 0, %s124
      %s128 = sphi 0, %s127
      %s144 = sphi 0, %s128
      %s150 = sphi 0, %s152
      %s153 = sphi 0, %s150
      %s154 = sphi 0, %s153
      %s170 = sphi 0, %s154
      %s176 = sphi 0, %s178
      %s179 = sphi 0, %s176
      %s180 = sphi 0, %s179
      %s196 = sphi 0, %s180
      %s202 = sphi 0, %s204
      %s205 = sphi 0, %s202
      %s206 = sphi 0, %s205
      %s222 = sphi 0, %s206
      %s228 = sphi 0, %s230
      %s231 = sphi 0, %s228
      %s232 = sphi 0, %s231
      %s248 = sphi 0, %s232
      %s254 = sphi 0, %s256
      %s257 = sphi 0, %s254
      %s258 = sphi 0, %s257
      %s274 = sphi 0, %s258
      %s280 = sphi 0, %s282
      %s283 = sphi 0, %s280
      %s284 = sphi 0, %s283
      %s300 = sphi 0, %s284
      %s306 = sphi 0, %s308
      %s309 = sphi 0, %s306
      %s310 = sphi 0, %s309
      %s326 = sphi 0, %s310
      %s332 = sphi 0, %s334
      %s335 = sphi 0, %s332
      %s336 = sphi 0, %s335
      %s352 = sphi 0, %s336
      %s358 = sphi 0, %s360
      %s361 = sphi 0, %s358
      %s362 = sphi 0, %s361
      %s378 = sphi 0, %s362
      %s384 = sphi 0, %s386
      %s387 = sphi 0, %s384
      %s388 = sphi 0, %s387
      %s404 = sphi 0, %s388
      %s408 = sphi 0, %s408
      %s410 = sphi 0, %s408
      %s411 = sphi 0, %s410
      %s425 = sphi 0, %s411
      %s429 = sphi 0, %s429
      %s431 = sphi 0, %s429
      %s432 = sphi 0, %s431
      %s446 = sphi 0, %s432
      %s452 = sphi 0, %s454
      %s455 = sphi 0, %s452
      %s456 = sphi 0, %s455
      %s472 = sphi 0, %s456
    $region4: #{tpu_custom_call.1} parent=1 // loop_header_branch
      %32 = sbr.rel (%p30) target = $region8
    $region5: #{tpu_custom_call.1} parent=1 // loop_body
      %s34 = ssub.s32 %s29, 1
      %s35 = ssub.s32 %s29, 2
      %s42 = sadd.s32 1, %s37
      %p43 = scmp.ge.s32.totalorder %s42, 2
      %s44 = scalar_select %p43, 0, %s42
      %s45 = sadd.s32 1, %s36
      %s46 = scalar_select %p43, %s45, %s36
      %p47 = scmp.ge.s32.totalorder %s46, 2
      %s48 = scalar_select %p47, 0, %s46
      %s49 = ssub.s32 %s36, %s48
      %p50 = scmp.eq.s32.totalorder %s49, 0
      %s52 = sadd.s32 %s51, 1
      %s53 = scalar_select %p50, %s51, %s52
      %p56 = pneg %p50
      %p57 = scmp.eq.s32.totalorder %s29, 3
      %p58 = por %p56, %p57
      %p59 = scmp.ne.s32.totalorder %s51, %s54
      %p60 = scmp.eq.s32.totalorder %s29, 0
      %p61 = por %p59, %p60
      %p62 = scmp.ne.s32.totalorder %s51, %s54
      %p63 = scmp.eq.s32.totalorder %s34, 3
      %p64 = por %p62, %p63
      %p65 = scmp.ne.s32.totalorder %s54, %s55
      %p66 = scmp.eq.s32.totalorder %s34, 0
      %p67 = por %p65, %p66
      %p68 = scmp.ne.s32.totalorder %s54, %s55
      %p69 = scmp.eq.s32.totalorder %s35, 3
      %p70 = por %p68, %p69
      %p72 = scmp.ne.s32.totalorder %s55, %s71
      %p73 = scmp.eq.s32.totalorder %s35, 0
      %p74 = por %p72, %p73
      %s76 = sadd.s32 %s75, 1
      %p79 = scmp.eq.s32.totalorder %s29, 3
      %p80 = scmp.ne.s32.totalorder %s75, %s77
      %p81 = scmp.eq.s32.totalorder %s29, 0
      %p82 = por %p80, %p81
      %p83 = scmp.ne.s32.totalorder %s75, %s77
      %p84 = scmp.eq.s32.totalorder %s34, 3
      %p85 = por %p83, %p84
      %p86 = scmp.ne.s32.totalorder %s77, %s78
      %p87 = scmp.eq.s32.totalorder %s34, 0
      %p88 = por %p86, %p87
      %p89 = scmp.ne.s32.totalorder %s77, %s78
      %p90 = scmp.eq.s32.totalorder %s35, 3
      %p91 = por %p89, %p90
      %p93 = scmp.ne.s32.totalorder %s78, %s92
      %p94 = scmp.eq.s32.totalorder %s35, 0
      %p95 = por %p93, %p94
      %s96 = ssub.s32 %s37, %s44
      %p97 = scmp.eq.s32.totalorder %s96, 0
      %s99 = sadd.s32 %s98, 1
      %s100 = scalar_select %p97, %s98, %s99
      %p103 = pneg %p97
      %p104 = scmp.eq.s32.totalorder %s29, 3
      %p105 = por %p103, %p104
      %p106 = scmp.ne.s32.totalorder %s98, %s101
      %p107 = scmp.eq.s32.totalorder %s29, 0
      %p108 = por %p106, %p107
      %p109 = scmp.ne.s32.totalorder %s98, %s101
      %p110 = scmp.eq.s32.totalorder %s34, 3
      %p111 = por %p109, %p110
      %p112 = scmp.ne.s32.totalorder %s101, %s102
      %p113 = scmp.eq.s32.totalorder %s34, 0
      %p114 = por %p112, %p113
      %p115 = scmp.ne.s32.totalorder %s101, %s102
      %p116 = scmp.eq.s32.totalorder %s35, 3
      %p117 = por %p115, %p116
      %p119 = scmp.ne.s32.totalorder %s102, %s118
      %p120 = scmp.eq.s32.totalorder %s35, 0
      %p121 = por %p119, %p120
      %s122 = ssub.s32 %s37, %s44
      %p123 = scmp.eq.s32.totalorder %s122, 0
      %s125 = sadd.s32 %s124, 1
      %s126 = scalar_select %p123, %s124, %s125
      %p129 = pneg %p123
      %p130 = scmp.eq.s32.totalorder %s29, 3
      %p131 = por %p129, %p130
      %p132 = scmp.ne.s32.totalorder %s124, %s127
      %p133 = scmp.eq.s32.totalorder %s29, 0
      %p134 = por %p132, %p133
      %p135 = scmp.ne.s32.totalorder %s124, %s127
      %p136 = scmp.eq.s32.totalorder %s34, 3
      %p137 = por %p135, %p136
      %p138 = scmp.ne.s32.totalorder %s127, %s128
      %p139 = scmp.eq.s32.totalorder %s34, 0
      %p140 = por %p138, %p139
      %p141 = scmp.ne.s32.totalorder %s127, %s128
      %p142 = scmp.eq.s32.totalorder %s35, 3
      %p143 = por %p141, %p142
      %p145 = scmp.ne.s32.totalorder %s128, %s144
      %p146 = scmp.eq.s32.totalorder %s35, 0
      %p147 = por %p145, %p146
      %s148 = ssub.s32 %s37, %s44
      %p149 = scmp.eq.s32.totalorder %s148, 0
      %s151 = sadd.s32 %s150, 1
      %s152 = scalar_select %p149, %s150, %s151
      %p155 = pneg %p149
      %p156 = scmp.eq.s32.totalorder %s29, 3
      %p157 = por %p155, %p156
      %p158 = scmp.ne.s32.totalorder %s150, %s153
      %p159 = scmp.eq.s32.totalorder %s29, 0
      %p160 = por %p158, %p159
      %p161 = scmp.ne.s32.totalorder %s150, %s153
      %p162 = scmp.eq.s32.totalorder %s34, 3
      %p163 = por %p161, %p162
      %p164 = scmp.ne.s32.totalorder %s153, %s154
      %p165 = scmp.eq.s32.totalorder %s34, 0
      %p166 = por %p164, %p165
      %p167 = scmp.ne.s32.totalorder %s153, %s154
      %p168 = scmp.eq.s32.totalorder %s35, 3
      %p169 = por %p167, %p168
      %p171 = scmp.ne.s32.totalorder %s154, %s170
      %p172 = scmp.eq.s32.totalorder %s35, 0
      %p173 = por %p171, %p172
      %s174 = ssub.s32 %s37, %s44
      %p175 = scmp.eq.s32.totalorder %s174, 0
      %s177 = sadd.s32 %s176, 1
      %s178 = scalar_select %p175, %s176, %s177
      %p181 = pneg %p175
      %p182 = scmp.eq.s32.totalorder %s29, 3
      %p183 = por %p181, %p182
      %p184 = scmp.ne.s32.totalorder %s176, %s179
      %p185 = scmp.eq.s32.totalorder %s29, 0
      %p186 = por %p184, %p185
      %p187 = scmp.ne.s32.totalorder %s176, %s179
      %p188 = scmp.eq.s32.totalorder %s34, 3
      %p189 = por %p187, %p188
      %p190 = scmp.ne.s32.totalorder %s179, %s180
      %p191 = scmp.eq.s32.totalorder %s34, 0
      %p192 = por %p190, %p191
      %p193 = scmp.ne.s32.totalorder %s179, %s180
      %p194 = scmp.eq.s32.totalorder %s35, 3
      %p195 = por %p193, %p194
      %p197 = scmp.ne.s32.totalorder %s180, %s196
      %p198 = scmp.eq.s32.totalorder %s35, 0
      %p199 = por %p197, %p198
      %s200 = ssub.s32 %s37, %s44
      %p201 = scmp.eq.s32.totalorder %s200, 0
      %s203 = sadd.s32 %s202, 1
      %s204 = scalar_select %p201, %s202, %s203
      %p207 = pneg %p201
      %p208 = scmp.eq.s32.totalorder %s29, 3
      %p209 = por %p207, %p208
      %p210 = scmp.ne.s32.totalorder %s202, %s205
      %p211 = scmp.eq.s32.totalorder %s29, 0
      %p212 = por %p210, %p211
      %p213 = scmp.ne.s32.totalorder %s202, %s205
      %p214 = scmp.eq.s32.totalorder %s34, 3
      %p215 = por %p213, %p214
      %p216 = scmp.ne.s32.totalorder %s205, %s206
      %p217 = scmp.eq.s32.totalorder %s34, 0
      %p218 = por %p216, %p217
      %p219 = scmp.ne.s32.totalorder %s205, %s206
      %p220 = scmp.eq.s32.totalorder %s35, 3
      %p221 = por %p219, %p220
      %p223 = scmp.ne.s32.totalorder %s206, %s222
      %p224 = scmp.eq.s32.totalorder %s35, 0
      %p225 = por %p223, %p224
      %s226 = ssub.s32 %s37, %s44
      %p227 = scmp.eq.s32.totalorder %s226, 0
      %s229 = sadd.s32 %s228, 1
      %s230 = scalar_select %p227, %s228, %s229
      %p233 = pneg %p227
      %p234 = scmp.eq.s32.totalorder %s29, 3
      %p235 = por %p233, %p234
      %p236 = scmp.ne.s32.totalorder %s228, %s231
      %p237 = scmp.eq.s32.totalorder %s29, 0
      %p238 = por %p236, %p237
      %p239 = scmp.ne.s32.totalorder %s228, %s231
      %p240 = scmp.eq.s32.totalorder %s34, 3
      %p241 = por %p239, %p240
      %p242 = scmp.ne.s32.totalorder %s231, %s232
      %p243 = scmp.eq.s32.totalorder %s34, 0
      %p244 = por %p242, %p243
      %p245 = scmp.ne.s32.totalorder %s231, %s232
      %p246 = scmp.eq.s32.totalorder %s35, 3
      %p247 = por %p245, %p246
      %p249 = scmp.ne.s32.totalorder %s232, %s248
      %p250 = scmp.eq.s32.totalorder %s35, 0
      %p251 = por %p249, %p250
      %s252 = ssub.s32 %s37, %s44
      %p253 = scmp.eq.s32.totalorder %s252, 0
      %s255 = sadd.s32 %s254, 1
      %s256 = scalar_select %p253, %s254, %s255
      %p259 = pneg %p253
      %p260 = scmp.eq.s32.totalorder %s29, 3
      %p261 = por %p259, %p260
      %p262 = scmp.ne.s32.totalorder %s254, %s257
      %p263 = scmp.eq.s32.totalorder %s29, 0
      %p264 = por %p262, %p263
      %p265 = scmp.ne.s32.totalorder %s254, %s257
      %p266 = scmp.eq.s32.totalorder %s34, 3
      %p267 = por %p265, %p266
      %p268 = scmp.ne.s32.totalorder %s257, %s258
      %p269 = scmp.eq.s32.totalorder %s34, 0
      %p270 = por %p268, %p269
      %p271 = scmp.ne.s32.totalorder %s257, %s258
      %p272 = scmp.eq.s32.totalorder %s35, 3
      %p273 = por %p271, %p272
      %p275 = scmp.ne.s32.totalorder %s258, %s274
      %p276 = scmp.eq.s32.totalorder %s35, 0
      %p277 = por %p275, %p276
      %s278 = ssub.s32 %s37, %s44
      %p279 = scmp.eq.s32.totalorder %s278, 0
      %s281 = sadd.s32 %s280, 1
      %s282 = scalar_select %p279, %s280, %s281
      %p285 = pneg %p279
      %p286 = scmp.eq.s32.totalorder %s29, 3
      %p287 = por %p285, %p286
      %p288 = scmp.ne.s32.totalorder %s280, %s283
      %p289 = scmp.eq.s32.totalorder %s29, 0
      %p290 = por %p288, %p289
      %p291 = scmp.ne.s32.totalorder %s280, %s283
      %p292 = scmp.eq.s32.totalorder %s34, 3
      %p293 = por %p291, %p292
      %p294 = scmp.ne.s32.totalorder %s283, %s284
      %p295 = scmp.eq.s32.totalorder %s34, 0
      %p296 = por %p294, %p295
      %p297 = scmp.ne.s32.totalorder %s283, %s284
      %p298 = scmp.eq.s32.totalorder %s35, 3
      %p299 = por %p297, %p298
      %p301 = scmp.ne.s32.totalorder %s284, %s300
      %p302 = scmp.eq.s32.totalorder %s35, 0
      %p303 = por %p301, %p302
      %s304 = ssub.s32 %s37, %s44
      %p305 = scmp.eq.s32.totalorder %s304, 0
      %s307 = sadd.s32 %s306, 1
      %s308 = scalar_select %p305, %s306, %s307
      %p311 = pneg %p305
      %p312 = scmp.eq.s32.totalorder %s29, 3
      %p313 = por %p311, %p312
      %p314 = scmp.ne.s32.totalorder %s306, %s309
      %p315 = scmp.eq.s32.totalorder %s29, 0
      %p316 = por %p314, %p315
      %p317 = scmp.ne.s32.totalorder %s306, %s309
      %p318 = scmp.eq.s32.totalorder %s34, 3
      %p319 = por %p317, %p318
      %p320 = scmp.ne.s32.totalorder %s309, %s310
      %p321 = scmp.eq.s32.totalorder %s34, 0
      %p322 = por %p320, %p321
      %p323 = scmp.ne.s32.totalorder %s309, %s310
      %p324 = scmp.eq.s32.totalorder %s35, 3
      %p325 = por %p323, %p324
      %p327 = scmp.ne.s32.totalorder %s310, %s326
      %p328 = scmp.eq.s32.totalorder %s35, 0
      %p329 = por %p327, %p328
      %s330 = ssub.s32 %s37, %s44
      %p331 = scmp.eq.s32.totalorder %s330, 0
      %s333 = sadd.s32 %s332, 1
      %s334 = scalar_select %p331, %s332, %s333
      %p337 = pneg %p331
      %p338 = scmp.eq.s32.totalorder %s29, 3
      %p339 = por %p337, %p338
      %p340 = scmp.ne.s32.totalorder %s332, %s335
      %p341 = scmp.eq.s32.totalorder %s29, 0
      %p342 = por %p340, %p341
      %p343 = scmp.ne.s32.totalorder %s332, %s335
      %p344 = scmp.eq.s32.totalorder %s34, 3
      %p345 = por %p343, %p344
      %p346 = scmp.ne.s32.totalorder %s335, %s336
      %p347 = scmp.eq.s32.totalorder %s34, 0
      %p348 = por %p346, %p347
      %p349 = scmp.ne.s32.totalorder %s335, %s336
      %p350 = scmp.eq.s32.totalorder %s35, 3
      %p351 = por %p349, %p350
      %p353 = scmp.ne.s32.totalorder %s336, %s352
      %p354 = scmp.eq.s32.totalorder %s35, 0
      %p355 = por %p353, %p354
      %s356 = ssub.s32 %s37, %s44
      %p357 = scmp.eq.s32.totalorder %s356, 0
      %s359 = sadd.s32 %s358, 1
      %s360 = scalar_select %p357, %s358, %s359
      %p363 = pneg %p357
      %p364 = scmp.eq.s32.totalorder %s29, 3
      %p365 = por %p363, %p364
      %p366 = scmp.ne.s32.totalorder %s358, %s361
      %p367 = scmp.eq.s32.totalorder %s29, 0
      %p368 = por %p366, %p367
      %p369 = scmp.ne.s32.totalorder %s358, %s361
      %p370 = scmp.eq.s32.totalorder %s34, 3
      %p371 = por %p369, %p370
      %p372 = scmp.ne.s32.totalorder %s361, %s362
      %p373 = scmp.eq.s32.totalorder %s34, 0
      %p374 = por %p372, %p373
      %p375 = scmp.ne.s32.totalorder %s361, %s362
      %p376 = scmp.eq.s32.totalorder %s35, 3
      %p377 = por %p375, %p376
      %p379 = scmp.ne.s32.totalorder %s362, %s378
      %p380 = scmp.eq.s32.totalorder %s35, 0
      %p381 = por %p379, %p380
      %s382 = ssub.s32 %s37, %s44
      %p383 = scmp.eq.s32.totalorder %s382, 0
      %s385 = sadd.s32 %s384, 1
      %s386 = scalar_select %p383, %s384, %s385
      %p389 = pneg %p383
      %p390 = scmp.eq.s32.totalorder %s29, 3
      %p391 = por %p389, %p390
      %p392 = scmp.ne.s32.totalorder %s384, %s387
      %p393 = scmp.eq.s32.totalorder %s29, 0
      %p394 = por %p392, %p393
      %p395 = scmp.ne.s32.totalorder %s384, %s387
      %p396 = scmp.eq.s32.totalorder %s34, 3
      %p397 = por %p395, %p396
      %p398 = scmp.ne.s32.totalorder %s387, %s388
      %p399 = scmp.eq.s32.totalorder %s34, 0
      %p400 = por %p398, %p399
      %p401 = scmp.ne.s32.totalorder %s387, %s388
      %p402 = scmp.eq.s32.totalorder %s35, 3
      %p403 = por %p401, %p402
      %p405 = scmp.ne.s32.totalorder %s388, %s404
      %p406 = scmp.eq.s32.totalorder %s35, 0
      %p407 = por %p405, %p406
      %s409 = sadd.s32 %s408, 1
      %p412 = scmp.eq.s32.totalorder %s29, 3
      %p413 = scmp.ne.s32.totalorder %s408, %s410
      %p414 = scmp.eq.s32.totalorder %s29, 0
      %p415 = por %p413, %p414
      %p416 = scmp.ne.s32.totalorder %s408, %s410
      %p417 = scmp.eq.s32.totalorder %s34, 3
      %p418 = por %p416, %p417
      %p419 = scmp.ne.s32.totalorder %s410, %s411
      %p420 = scmp.eq.s32.totalorder %s34, 0
      %p421 = por %p419, %p420
      %p422 = scmp.ne.s32.totalorder %s410, %s411
      %p423 = scmp.eq.s32.totalorder %s35, 3
      %p424 = por %p422, %p423
      %p426 = scmp.ne.s32.totalorder %s411, %s425
      %p427 = scmp.eq.s32.totalorder %s35, 0
      %p428 = por %p426, %p427
      %s430 = sadd.s32 %s429, 1
      %p433 = scmp.eq.s32.totalorder %s29, 3
      %p434 = scmp.ne.s32.totalorder %s429, %s431
      %p435 = scmp.eq.s32.totalorder %s29, 0
      %p436 = por %p434, %p435
      %p437 = scmp.ne.s32.totalorder %s429, %s431
      %p438 = scmp.eq.s32.totalorder %s34, 3
      %p439 = por %p437, %p438
      %p440 = scmp.ne.s32.totalorder %s431, %s432
      %p441 = scmp.eq.s32.totalorder %s34, 0
      %p442 = por %p440, %p441
      %p443 = scmp.ne.s32.totalorder %s431, %s432
      %p444 = scmp.eq.s32.totalorder %s35, 3
      %p445 = por %p443, %p444
      %p447 = scmp.ne.s32.totalorder %s432, %s446
      %p448 = scmp.eq.s32.totalorder %s35, 0
      %p449 = por %p447, %p448
      %s450 = ssub.s32 %s36, %s48
      %p451 = scmp.eq.s32.totalorder %s450, 0
      %s453 = sadd.s32 %s452, 1
      %s454 = scalar_select %p451, %s452, %s453
      %p457 = pneg %p451
      %p458 = scmp.eq.s32.totalorder %s29, 3
      %p459 = por %p457, %p458
      %p460 = scmp.ne.s32.totalorder %s452, %s455
      %p461 = scmp.eq.s32.totalorder %s29, 0
      %p462 = por %p460, %p461
      %p463 = scmp.ne.s32.totalorder %s452, %s455
      %p464 = scmp.eq.s32.totalorder %s34, 3
      %p465 = por %p463, %p464
      %p466 = scmp.ne.s32.totalorder %s455, %s456
      %p467 = scmp.eq.s32.totalorder %s34, 0
      %p468 = por %p466, %p467
      %p469 = scmp.ne.s32.totalorder %s455, %s456
      %p470 = scmp.eq.s32.totalorder %s35, 3
      %p471 = por %p469, %p470
      %p473 = scmp.ne.s32.totalorder %s456, %s472
      %p474 = scmp.eq.s32.totalorder %s35, 0
      %p475 = por %p473, %p474
      %p476 = scmp.le.s32.totalorder 1, %s29
      %p477 = scmp.lt.s32.totalorder %s29, 5
      %p478 = pnand %p476, %p477
      %p479 = pneg %p478
      // Predicated region
      $region9: #{tpu_custom_call.1} parent=5 // pred_check
        _
      $region10: #{tpu_custom_call.1} parent=5 // pred_check_branch
        %481 = sbr.rel (%p478) target = $region12
      $region11: #{tpu_custom_call.1} parent=5 // pred_region
        %s482 = ssub.s32 %s29, 1
        // Predicated region
        $region13: #{tpu_custom_call.1} parent=11 // pred_check
          %p483 = pneg %p88
        $region14: #{tpu_custom_call.1} parent=11 // pred_check_branch
          %485 = sbr.rel (%p483) target = $region16
        $region15: #{tpu_custom_call.1} parent=11 // pred_region
          %s487 = ssub.s32 128, 128
          %488 = vsyncadd [#allocation8], %s487
          %s490 = sshll.u32 [#allocation7], 4
          %s491 = int_to_ptr.vmem [resolvable:$true] %s490
          %493 = dma.hbm_to_vmem [thread:$0]  %s1, 128, %s491, [#allocation8]
        $region16: #{tpu_custom_call.1} parent=11 // pred_fallthru
          _
        // Predicated region
        $region17: #{tpu_custom_call.1} parent=11 // pred_check
          %p494 = pneg %p421
        $region18: #{tpu_custom_call.1} parent=11 // pred_check_branch
          %496 = sbr.rel (%p494) target = $region20
        $region19: #{tpu_custom_call.1} parent=11 // pred_region
          _
        $region20: #{tpu_custom_call.1} parent=11 // pred_fallthru
          _
        // Predicated region
        $region21: #{tpu_custom_call.1} parent=11 // pred_check
          %p497 = pneg %p442
        $region22: #{tpu_custom_call.1} parent=11 // pred_check_branch
          %499 = sbr.rel (%p497) target = $region24
        $region23: #{tpu_custom_call.1} parent=11 // pred_region
          _
        $region24: #{tpu_custom_call.1} parent=11 // pred_fallthru
          _
      $region12: #{tpu_custom_call.1} parent=5 // pred_fallthru
        _
      %p500 = scmp.lt.s32.totalorder %s29, 4
      // Predicated region
      $region25: #{tpu_custom_call.1} parent=5 // pred_check
        %p501 = pneg %p500
      $region26: #{tpu_custom_call.1} parent=5 // pred_check_branch
        %503 = sbr.rel (%p501) target = $region28
      $region27: #{tpu_custom_call.1} parent=5 // pred_region
        // Predicated region
        $region29: #{tpu_custom_call.1} parent=27 // pred_check
          %p504 = pneg %p61
        $region30: #{tpu_custom_call.1} parent=27 // pred_check_branch
          %506 = sbr.rel (%p504) target = $region32
        $region31: #{tpu_custom_call.1} parent=27 // pred_region
          %s507 = sand.u32 %s29, 1
          %s508 = scalar_lea.sflag [#allocation5], %s507
          %s509 = sand.u32 %s51, 1
          %s510 = smul.addr %s509, 8
          %s511 = scalar_lea.vmem [#allocation4], %s510
          %s513 = ssub.s32 128, 128
          %514 = vsyncadd %s508, %s513
          %s515 = smul.addr %s36, 128
          %s516 = scalar_lea.hbm %s0, %s515
          %s518 = sshll.u32 %s511, 4
          %s519 = int_to_ptr.vmem [resolvable:$true] %s518
          %521 = dma.hbm_to_vmem [thread:$0]  %s516, 128, %s519, %s508
        $region32: #{tpu_custom_call.1} parent=27 // pred_fallthru
          _
        // Predicated region
        $region33: #{tpu_custom_call.1} parent=27 // pred_check
          %p522 = pneg %p108
        $region34: #{tpu_custom_call.1} parent=27 // pred_check_branch
          %524 = sbr.rel (%p522) target = $region36
        $region35: #{tpu_custom_call.1} parent=27 // pred_region
          %p525 = scmp.lt.s32.totalorder %s37, 1
          %s526 = scalar_select %p525, %s37, 1
          %s527 = scalar_lea.vmem %s2, %s526
        $region36: #{tpu_custom_call.1} parent=27 // pred_fallthru
          _
        // Predicated region
        $region37: #{tpu_custom_call.1} parent=27 // pred_check
          %p528 = pneg %p134
        $region38: #{tpu_custom_call.1} parent=27 // pred_check_branch
          %530 = sbr.rel (%p528) target = $region40
        $region39: #{tpu_custom_call.1} parent=27 // pred_region
          %p531 = scmp.lt.s32.totalorder %s37, 1
          %s532 = scalar_select %p531, %s37, 1
          %s533 = scalar_lea.vmem %s3, %s532
        $region40: #{tpu_custom_call.1} parent=27 // pred_fallthru
          _
        // Predicated region
        $region41: #{tpu_custom_call.1} parent=27 // pred_check
          %p534 = pneg %p160
        $region42: #{tpu_custom_call.1} parent=27 // pred_check_branch
          %536 = sbr.rel (%p534) target = $region44
        $region43: #{tpu_custom_call.1} parent=27 // pred_region
          %p537 = scmp.lt.s32.totalorder %s37, 1
          %s538 = scalar_select %p537, %s37, 1
          %s539 = smul.addr %s538, 4
          %s540 = smul.addr %s539, 4
          %s541 = scalar_lea.vmem %s4, %s540
        $region44: #{tpu_custom_call.1} parent=27 // pred_fallthru
          _
        // Predicated region
        $region45: #{tpu_custom_call.1} parent=27 // pred_check
          %p542 = pneg %p186
        $region46: #{tpu_custom_call.1} parent=27 // pred_check_branch
          %544 = sbr.rel (%p542) target = $region48
        $region47: #{tpu_custom_call.1} parent=27 // pred_region
          %p545 = scmp.lt.s32.totalorder %s37, 1
          %s546 = scalar_select %p545, %s37, 1
          %s547 = scalar_lea.vmem %s5, %s546
        $region48: #{tpu_custom_call.1} parent=27 // pred_fallthru
          _
        // Predicated region
        $region49: #{tpu_custom_call.1} parent=27 // pred_check
          %p548 = pneg %p212
        $region50: #{tpu_custom_call.1} parent=27 // pred_check_branch
          %550 = sbr.rel (%p548) target = $region52
        $region51: #{tpu_custom_call.1} parent=27 // pred_region
          %p551 = scmp.lt.s32.totalorder %s37, 1
          %s552 = scalar_select %p551, %s37, 1
          %s553 = smul.addr %s552, 4
          %s554 = smul.addr %s553, 4
          %s555 = scalar_lea.vmem %s6, %s554
        $region52: #{tpu_custom_call.1} parent=27 // pred_fallthru
          _
        // Predicated region
        $region53: #{tpu_custom_call.1} parent=27 // pred_check
          %p556 = pneg %p238
        $region54: #{tpu_custom_call.1} parent=27 // pred_check_branch
          %558 = sbr.rel (%p556) target = $region56
        $region55: #{tpu_custom_call.1} parent=27 // pred_region
          %p559 = scmp.lt.s32.totalorder %s37, 1
          %s560 = scalar_select %p559, %s37, 1
          %s561 = scalar_lea.vmem %s7, %s560
        $region56: #{tpu_custom_call.1} parent=27 // pred_fallthru
          _
        // Predicated region
        $region57: #{tpu_custom_call.1} parent=27 // pred_check
          %p562 = pneg %p264
        $region58: #{tpu_custom_call.1} parent=27 // pred_check_branch
          %564 = sbr.rel (%p562) target = $region60
        $region59: #{tpu_custom_call.1} parent=27 // pred_region
          %p565 = scmp.lt.s32.totalorder %s37, 1
          %s566 = scalar_select %p565, %s37, 1
          %s567 = scalar_lea.vmem %s8, %s566
        $region60: #{tpu_custom_call.1} parent=27 // pred_fallthru
          _
        // Predicated region
        $region61: #{tpu_custom_call.1} parent=27 // pred_check
          %p568 = pneg %p290
        $region62: #{tpu_custom_call.1} parent=27 // pred_check_branch
          %570 = sbr.rel (%p568) target = $region64
        $region63: #{tpu_custom_call.1} parent=27 // pred_region
          %p571 = scmp.lt.s32.totalorder %s37, 1
          %s572 = scalar_select %p571, %s37, 1
          %s573 = scalar_lea.vmem %s9, %s572
        $region64: #{tpu_custom_call.1} parent=27 // pred_fallthru
          _
        // Predicated region
        $region65: #{tpu_custom_call.1} parent=27 // pred_check
          %p574 = pneg %p316
        $region66: #{tpu_custom_call.1} parent=27 // pred_check_branch
          %576 = sbr.rel (%p574) target = $region68
        $region67: #{tpu_custom_call.1} parent=27 // pred_region
          %p577 = scmp.lt.s32.totalorder %s37, 1
          %s578 = scalar_select %p577, %s37, 1
          %s579 = smul.addr %s578, 4
          %s580 = smul.addr %s579, 4
          %s581 = scalar_lea.vmem %s10, %s580
        $region68: #{tpu_custom_call.1} parent=27 // pred_fallthru
          _
        // Predicated region
        $region69: #{tpu_custom_call.1} parent=27 // pred_check
          %p582 = pneg %p342
        $region70: #{tpu_custom_call.1} parent=27 // pred_check_branch
          %584 = sbr.rel (%p582) target = $region72
        $region71: #{tpu_custom_call.1} parent=27 // pred_region
          %s585 = sand.u32 %s29, 1
          %s586 = scalar_lea.sflag [#allocation5], %s585
          %s587 = sand.u32 %s332, 1
          %s588 = scalar_lea.vmem [#allocation9], %s587
          %s590 = ssub.s32 16, 16
          %591 = vsyncadd %s586, %s590
          %s592 = smul.addr %s37, 16
          %s593 = scalar_lea.hbm %s11, %s592
          %s595 = sshll.u32 %s588, 4
          %s596 = int_to_ptr.vmem [resolvable:$true] %s595
          %598 = dma.hbm_to_vmem [thread:$0]  %s593, 16, %s596, %s586
        $region72: #{tpu_custom_call.1} parent=27 // pred_fallthru
          _
        // Predicated region
        $region73: #{tpu_custom_call.1} parent=27 // pred_check
          %p599 = pneg %p368
        $region74: #{tpu_custom_call.1} parent=27 // pred_check_branch
          %601 = sbr.rel (%p599) target = $region76
        $region75: #{tpu_custom_call.1} parent=27 // pred_region
          %p602 = scmp.lt.s32.totalorder %s37, 1
          %s603 = scalar_select %p602, %s37, 1
          %s604 = smul.addr %s603, 8
          %s605 = smul.addr %s604, 4
          %s606 = scalar_lea.vmem %s12, %s605
        $region76: #{tpu_custom_call.1} parent=27 // pred_fallthru
          _
        // Predicated region
        $region77: #{tpu_custom_call.1} parent=27 // pred_check
          %p607 = pneg %p394
        $region78: #{tpu_custom_call.1} parent=27 // pred_check_branch
          %609 = sbr.rel (%p607) target = $region80
        $region79: #{tpu_custom_call.1} parent=27 // pred_region
          %p610 = scmp.lt.s32.totalorder %s37, 1
          %s611 = scalar_select %p610, %s37, 1
          %s612 = scalar_lea.vmem %s13, %s611
        $region80: #{tpu_custom_call.1} parent=27 // pred_fallthru
          _
      $region28: #{tpu_custom_call.1} parent=5 // pred_fallthru
        _
      %p613 = scmp.le.s32.totalorder 1, %s29
      %p614 = scmp.lt.s32.totalorder %s29, 5
      %p615 = pnand %p613, %p614
      %p616 = pneg %p615
      // Predicated region
      $region81: #{tpu_custom_call.1} parent=5 // pred_check
        _
      $region82: #{tpu_custom_call.1} parent=5 // pred_check_branch
        %618 = sbr.rel (%p615) target = $region84
      $region83: #{tpu_custom_call.1} parent=5 // pred_region
        %s619 = ssub.s32 %s29, 1
        %s620 = sand.u32 %s34, 1
        %s621 = scalar_lea.sflag [#allocation5], %s620
        %s622 = sand.u32 %s54, 1
        %s623 = smul.addr %s622, 8
        %s624 = scalar_lea.vmem [#allocation4], %s623
        // Predicated region
        $region85: #{tpu_custom_call.1} parent=83 // pred_check
          %p625 = pneg %p67
        $region86: #{tpu_custom_call.1} parent=83 // pred_check_branch
          %627 = sbr.rel (%p625) target = $region88
        $region87: #{tpu_custom_call.1} parent=83 // pred_region
          %628 = dma.done %s621, 128
        $region88: #{tpu_custom_call.1} parent=83 // pred_fallthru
          _
        // Predicated region
        $region89: #{tpu_custom_call.1} parent=83 // pred_check
          %p629 = pneg %p88
        $region90: #{tpu_custom_call.1} parent=83 // pred_check_branch
          %631 = sbr.rel (%p629) target = $region92
        $region91: #{tpu_custom_call.1} parent=83 // pred_region
          %632 = dma.done [#allocation8], 128
        $region92: #{tpu_custom_call.1} parent=83 // pred_fallthru
          _
        %s633 = sand.u32 %s34, 1
        %s634 = scalar_lea.sflag [#allocation5], %s633
        %s635 = sand.u32 %s335, 1
        %s636 = scalar_lea.vmem [#allocation9], %s635
        // Predicated region
        $region93: #{tpu_custom_call.1} parent=83 // pred_check
          %p637 = pneg %p348
        $region94: #{tpu_custom_call.1} parent=83 // pred_check_branch
          %639 = sbr.rel (%p637) target = $region96
        $region95: #{tpu_custom_call.1} parent=83 // pred_region
          %640 = dma.done %s634, 16
        $region96: #{tpu_custom_call.1} parent=83 // pred_fallthru
          _
        %s641 = sand.u32 %s34, 1
        %s642 = scalar_lea.sflag [#allocation5], %s641
        %s643 = sand.u32 %s54, 1
        %s644 = smul.addr %s643, 8
        %s645 = scalar_lea.vmem [#allocation4], %s644
        %p646 = pneg %p67
        %p647 = pneg %p64
        %p648 = pneg %p88
        %p649 = pneg %p85
        %p650 = scmp.lt.s32.totalorder %s39, 1
        %s651 = scalar_select %p650, %s39, 1
        %s652 = scalar_lea.vmem %s2, %s651
        %p653 = pneg %p114
        %p654 = pneg %p111
        %p655 = scmp.lt.s32.totalorder %s39, 1
        %s656 = scalar_select %p655, %s39, 1
        %s657 = scalar_lea.vmem %s3, %s656
        %p658 = pneg %p140
        %p659 = pneg %p137
        %p660 = scmp.lt.s32.totalorder %s39, 1
        %s661 = scalar_select %p660, %s39, 1
        %s662 = smul.addr %s661, 4
        %s663 = smul.addr %s662, 4
        %s664 = scalar_lea.vmem %s4, %s663
        %p665 = pneg %p166
        %p666 = pneg %p163
        %p667 = scmp.lt.s32.totalorder %s39, 1
        %s668 = scalar_select %p667, %s39, 1
        %s669 = scalar_lea.vmem %s5, %s668
        %p670 = pneg %p192
        %p671 = pneg %p189
        %p672 = scmp.lt.s32.totalorder %s39, 1
        %s673 = scalar_select %p672, %s39, 1
        %s674 = smul.addr %s673, 4
        %s675 = smul.addr %s674, 4
        %s676 = scalar_lea.vmem %s6, %s675
        %p677 = pneg %p218
        %p678 = pneg %p215
        %p679 = scmp.lt.s32.totalorder %s39, 1
        %s680 = scalar_select %p679, %s39, 1
        %s681 = scalar_lea.vmem %s7, %s680
        %p682 = pneg %p244
        %p683 = pneg %p241
        %p684 = scmp.lt.s32.totalorder %s39, 1
        %s685 = scalar_select %p684, %s39, 1
        %s686 = scalar_lea.vmem %s8, %s685
        %p687 = pneg %p270
        %p688 = pneg %p267
        %p689 = scmp.lt.s32.totalorder %s39, 1
        %s690 = scalar_select %p689, %s39, 1
        %s691 = scalar_lea.vmem %s9, %s690
        %p692 = pneg %p296
        %p693 = pneg %p293
        %p694 = scmp.lt.s32.totalorder %s39, 1
        %s695 = scalar_select %p694, %s39, 1
        %s696 = smul.addr %s695, 4
        %s697 = smul.addr %s696, 4
        %s698 = scalar_lea.vmem %s10, %s697
        %p699 = pneg %p322
        %p700 = pneg %p319
        %s701 = sand.u32 %s34, 1
        %s702 = scalar_lea.sflag [#allocation5], %s701
        %s703 = sand.u32 %s335, 1
        %s704 = scalar_lea.vmem [#allocation9], %s703
        %p705 = pneg %p348
        %p706 = pneg %p345
        %p707 = scmp.lt.s32.totalorder %s39, 1
        %s708 = scalar_select %p707, %s39, 1
        %s709 = smul.addr %s708, 8
        %s710 = smul.addr %s709, 4
        %s711 = scalar_lea.vmem %s12, %s710
        %p712 = pneg %p374
        %p713 = pneg %p371
        %p714 = scmp.lt.s32.totalorder %s39, 1
        %s715 = scalar_select %p714, %s39, 1
        %s716 = scalar_lea.vmem %s13, %s715
        %p717 = pneg %p400
        %p718 = pneg %p397
        %p719 = pneg %p421
        %p720 = pneg %p418
        %p721 = pneg %p442
        %p722 = pneg %p439
        %p723 = pneg %p468
        %p724 = pneg %p465
        %s725 = sand.u32 %s455, 1
        %s726 = scalar_lea.sflag [#allocation6], %s725
        %s727 = sand.u32 %s455, 1
        %s728 = smul.addr %s727, 8
        %s729 = scalar_lea.vmem [#allocation10], %s728
        %p730 = scmp.lt.s32.totalorder %s39, 1
        %s731 = scalar_select %p730, %s39, 1
        %s732 = scalar_lea.vmem %s2, %s731
        %p733 = scmp.lt.s32.totalorder %s39, 1
        %s734 = scalar_select %p733, %s39, 1
        %s735 = scalar_lea.vmem %s3, %s734
        %p736 = scmp.lt.s32.totalorder %s39, 1
        %s737 = scalar_select %p736, %s39, 1
        %s738 = smul.addr %s737, 4
        %s739 = smul.addr %s738, 4
        %s740 = scalar_lea.vmem %s4, %s739
        %p741 = scmp.lt.s32.totalorder %s39, 1
        %s742 = scalar_select %p741, %s39, 1
        %s743 = scalar_lea.vmem %s5, %s742
        %p744 = scmp.lt.s32.totalorder %s39, 1
        %s745 = scalar_select %p744, %s39, 1
        %s746 = smul.addr %s745, 4
        %s747 = smul.addr %s746, 4
        %s748 = scalar_lea.vmem %s6, %s747
        %p749 = scmp.lt.s32.totalorder %s39, 1
        %s750 = scalar_select %p749, %s39, 1
        %s751 = scalar_lea.vmem %s7, %s750
        %p752 = scmp.lt.s32.totalorder %s39, 1
        %s753 = scalar_select %p752, %s39, 1
        %s754 = scalar_lea.vmem %s8, %s753
        %p755 = scmp.lt.s32.totalorder %s39, 1
        %s756 = scalar_select %p755, %s39, 1
        %s757 = scalar_lea.vmem %s9, %s756
        %p758 = scmp.lt.s32.totalorder %s39, 1
        %s759 = scalar_select %p758, %s39, 1
        %s760 = smul.addr %s759, 4
        %s761 = smul.addr %s760, 4
        %s762 = scalar_lea.vmem %s10, %s761
        %p763 = scmp.lt.s32.totalorder %s39, 1
        %s764 = scalar_select %p763, %s39, 1
        %s765 = smul.addr %s764, 8
        %s766 = smul.addr %s765, 4
        %s767 = scalar_lea.vmem %s12, %s766
        %p768 = scmp.lt.s32.totalorder %s39, 1
        %s769 = scalar_select %p768, %s39, 1
        %s770 = scalar_lea.vmem %s13, %s769
        %p772 = scmp.eq.s32.totalorder %s39, 0
        // Predicated region
        $region97: #{tpu_custom_call.1} parent=83 // pred_check
          %p773 = pneg %p772
        $region98: #{tpu_custom_call.1} parent=83 // pred_check_branch
          %775 = sbr.rel (%p773) target = $region100
        $region99: #{tpu_custom_call.1} parent=83 // pred_region
          %v776 = vld [vmem:[%s624] sm:$0xff]
          %v777 = vld [vmem:[#allocation7] sm:$0xff]
          %v778 = vadd.f32 %v776, %v777
          %vm779 = vcmask 261120
          %780 = vst.msk [vmem:[#allocation2] sm:$0xff] %vm779, %v778
        $region100: #{tpu_custom_call.1} parent=83 // pred_fallthru
          _
        %v781 = vld [vmem:[#allocation2] sm:$0xff]
        %v782 = vld [vmem:[%s732] sm:$0x1]
        %v783 = vld [vmem:[%s735] sm:$0x1]
        %vm784 = vcmask 261120
        %v785 = vsel %vm784, %v781, 0.0
        %786 = vadd.xlane.f32.xlu0 %v785
        %v787 = vpop.xlane.xlu0 %786
        %v788 = vrcp.pop 32.0
        %v789 = vmul.f32 %v787, %v788
        %v790 = vsub.f32 %v781, %v789
        %v791 = vmul.f32 %v790, %v790
        %v792 = vsel %vm784, %v791, 0.0
        %793 = vadd.xlane.f32.xlu0 %v792
        %v794 = vpop.xlane.xlu0 %793
        %v795 = vmul.f32 %v794, %v788
        %v796 = vadd.f32 %v795, 1e-06
        %v797 = vrsqrt.pop %v796
        %v798 = vmul.f32 %v790, %v797
        %v800 = vlaneseq
        %v801 = vshrl.u32 %v800, 7
        %v802 = vsub.s32 0, %v801
        %v803 = vrot.slane %v782, %v802
        %v805 = vmul.f32 %v798, %v803
        %v807 = vlaneseq
        %v808 = vshrl.u32 %v807, 7
        %v809 = vsub.s32 0, %v808
        %v810 = vrot.slane %v783, %v809
        %v812 = vadd.f32 %v805, %v810
        %v813 = vpack.c.bf16 %v812, %v812
        %v814 = vld [vmem:[%s740] sm:$0xf]
        %v815 = vld [vmem:[%s740 + $0x4] sm:$0xf]
        %v816 = vld [vmem:[%s740 + $0x8] sm:$0xf]
        %v817 = vld [vmem:[%s740 + $0xc] sm:$0xf]
        %v818 = vld [vmem:[%s743] sm:$0x1]
        %v820 = vlaneseq
        %v821 = vshrl.u32 %v820, 7
        %v822 = vsub.s32 0, %v821
        %v823 = vrot.slane %v818, %v822
        %v829 = vunpack.c.l.b16 %v814
        %v830 = vunpack.c.l.b16 %v815
        %v831 = vunpack.c.l.b16 %v816
        %v832 = vunpack.c.l.b16 %v817
        %v833 = vpack.c.b16 %v830, %v829
        %v834 = vpack.c.b16 %v832, %v831
        %v838 = vsel %vm784, %v813, 0
        %840 = vmatprep.subr.bf16.mxu0 0
        %841 = vmatpush1.bf16.msra.mxu0 %v833
        %842 = vmatprep.subr.bf16.mxu0 0
        %843 = vmatpush1.bf16.msra.mxu0 %v834
        %844 = vmatprep.subr.bf16.mxu0 0
        %845 = vmatpush1.bf16.msra.mxu0 0
        %846 = vmatprep.subr.bf16.mxu0 0
        %847 = vmatpush1.bf16.msra.mxu0 0
        %848 = vmatprep.subr.bf16.mxu0 0
        %849 = vmatpush1.bf16.msra.mxu0 0
        %850 = vmatprep.subr.bf16.mxu0 0
        %851 = vmatpush1.bf16.msra.mxu0 0
        %852 = vmatprep.subr.bf16.mxu0 0
        %853 = vmatpush1.bf16.msra.mxu0 0
        %854 = vmatprep.subr.bf16.mxu0 0
        %855 = vmatpush1.bf16.msra.mxu0 0
        %856 = vmatprep.subr.bf16.mxu0 0
        %857 = vmatpush1.bf16.msra.mxu0 0
        %858 = vmatprep.subr.bf16.mxu0 0
        %859 = vmatpush1.bf16.msra.mxu0 0
        %860 = vmatprep.subr.bf16.mxu0 0
        %861 = vmatpush1.bf16.msra.mxu0 0
        %862 = vmatprep.subr.bf16.mxu0 0
        %863 = vmatpush1.bf16.msra.mxu0 0
        %864 = vmatprep.subr.bf16.mxu0 0
        %865 = vmatpush1.bf16.msra.mxu0 0
        %866 = vmatprep.subr.bf16.mxu0 0
        %867 = vmatpush1.bf16.msra.mxu0 0
        %868 = vmatprep.subr.bf16.mxu0 0
        %869 = vmatpush1.bf16.msra.mxu0 0
        %870 = vmatprep.subr.bf16.mxu0 0
        %871 = vmatpush1.bf16.msra.mxu0 0
        %872 = vmatprep.mubr.bf16.mxu0 0
        %873 = vmatmul.mubr.bf16.gmra.mrb[0].mxu0 %v838
        %v874 = vpop.f32.mrb[0].mxu0
        %v875 = vadd.f32 %v823, %v874
        %v876 = vpop.f32.mrb[0].mxu0
        %v877 = vpop.f32.mrb[0].mxu0
        %v878 = vpop.f32.mrb[0].mxu0
        %879 = vdwg.mxu0
        %v880 = vpack.c.bf16 %v875, %v875
        %882 = vrot.lane.b32.xlu0 %v880, 96
        %v883 = vpop.permute.xlu0 %882
        %vm884 = vcmask 64512
        %v886 = vsel %vm884, %v880, 0
        %v889 = vsel %vm884, %v883, 0
        %891 = vmatprep.subr.bf16.mxu0 0
        %892 = vmatpush1.bf16.xpose.msra.mxu0 %v889
        %893 = vmatprep.subr.bf16.mxu0 0
        %894 = vmatpush1.bf16.xpose.msra.mxu0 0
        %895 = vmatprep.subr.bf16.mxu0 0
        %896 = vmatpush1.bf16.xpose.msra.mxu0 0
        %897 = vmatprep.subr.bf16.mxu0 0
        %898 = vmatpush1.bf16.xpose.msra.mxu0 0
        %899 = vmatprep.subr.bf16.mxu0 0
        %900 = vmatpush1.bf16.xpose.msra.mxu0 0
        %901 = vmatprep.subr.bf16.mxu0 0
        %902 = vmatpush1.bf16.xpose.msra.mxu0 0
        %903 = vmatprep.subr.bf16.mxu0 0
        %904 = vmatpush1.bf16.xpose.msra.mxu0 0
        %905 = vmatprep.subr.bf16.mxu0 0
        %906 = vmatpush1.bf16.xpose.msra.mxu0 0
        %907 = vmatprep.subr.bf16.mxu0 0
        %908 = vmatpush1.bf16.xpose.msra.mxu0 0
        %909 = vmatprep.subr.bf16.mxu0 0
        %910 = vmatpush1.bf16.xpose.msra.mxu0 0
        %911 = vmatprep.subr.bf16.mxu0 0
        %912 = vmatpush1.bf16.xpose.msra.mxu0 0
        %913 = vmatprep.subr.bf16.mxu0 0
        %914 = vmatpush1.bf16.xpose.msra.mxu0 0
        %915 = vmatprep.subr.bf16.mxu0 0
        %916 = vmatpush1.bf16.xpose.msra.mxu0 0
        %917 = vmatprep.subr.bf16.mxu0 0
        %918 = vmatpush1.bf16.xpose.msra.mxu0 0
        %919 = vmatprep.subr.bf16.mxu0 0
        %920 = vmatpush1.bf16.xpose.msra.mxu0 0
        %921 = vmatprep.subr.bf16.mxu0 0
        %922 = vmatpush1.bf16.xpose.msra.mxu0 0
        %923 = vmatprep.mubr.bf16.mxu0 0
        %924 = vmatmul.mubr.bf16.gmra.mrb[0].mxu0 %v886
        %v925 = vpop.f32.mrb[0].mxu0
        %v926 = vadd.f32 0.0, %v925
        %v927 = vpop.f32.mrb[0].mxu0
        %v928 = vpop.f32.mrb[0].mxu0
        %v929 = vpop.f32.mrb[0].mxu0
        %930 = vdwg.mxu0
        %v931 = vmul.f32 %v926, 0.35355338
        %v932 = vsel %vm884, %v931, -inf
        %933 = vmax.xlane.f32.xlu0 %v932
        %v934 = vpop.xlane.xlu0 %933
        %v935 = vsub.f32 %v931, %v934
        %v936 = vmul.f32 %v935, 1.442695
        %v937 = vpow.pop %v936
        %v938 = vsel %vm884, %v937, 0.0
        %939 = vadd.xlane.f32.xlu0 %v938
        %v940 = vpop.xlane.xlu0 %939
        %v941 = vrcp.pop %v940
        %v942 = vmul.f32 %v937, %v941
        %v943 = vpack.c.bf16 %v942, %v942
        %944 = vrot.lane.b32.xlu0 %v880, 64
        %v945 = vpop.permute.xlu0 %944
        %v947 = vsel %vm884, %v943, 0
        %vm949 = vcmask 1043456
        %v951 = vsel %vm949, %v945, 0
        %953 = vmatprep.subr.bf16.mxu0 0
        %954 = vmatpush1.bf16.msra.mxu0 %v951
        %955 = vmatprep.subr.bf16.mxu0 0
        %956 = vmatpush1.bf16.msra.mxu0 0
        %957 = vmatprep.subr.bf16.mxu0 0
        %958 = vmatpush1.bf16.msra.mxu0 0
        %959 = vmatprep.subr.bf16.mxu0 0
        %960 = vmatpush1.bf16.msra.mxu0 0
        %961 = vmatprep.subr.bf16.mxu0 0
        %962 = vmatpush1.bf16.msra.mxu0 0
        %963 = vmatprep.subr.bf16.mxu0 0
        %964 = vmatpush1.bf16.msra.mxu0 0
        %965 = vmatprep.subr.bf16.mxu0 0
        %966 = vmatpush1.bf16.msra.mxu0 0
        %967 = vmatprep.subr.bf16.mxu0 0
        %968 = vmatpush1.bf16.msra.mxu0 0
        %969 = vmatprep.subr.bf16.mxu0 0
        %970 = vmatpush1.bf16.msra.mxu0 0
        %971 = vmatprep.subr.bf16.mxu0 0
        %972 = vmatpush1.bf16.msra.mxu0 0
        %973 = vmatprep.subr.bf16.mxu0 0
        %974 = vmatpush1.bf16.msra.mxu0 0
        %975 = vmatprep.subr.bf16.mxu0 0
        %976 = vmatpush1.bf16.msra.mxu0 0
        %977 = vmatprep.subr.bf16.mxu0 0
        %978 = vmatpush1.bf16.msra.mxu0 0
        %979 = vmatprep.subr.bf16.mxu0 0
        %980 = vmatpush1.bf16.msra.mxu0 0
        %981 = vmatprep.subr.bf16.mxu0 0
        %982 = vmatpush1.bf16.msra.mxu0 0
        %983 = vmatprep.subr.bf16.mxu0 0
        %984 = vmatpush1.bf16.msra.mxu0 0
        %985 = vmatprep.mubr.bf16.mxu0 0
        %986 = vmatmul.mubr.bf16.gmra.mrb[0].mxu0 %v947
        %v987 = vpop.f32.mrb[0].mxu0
        %v988 = vadd.f32 0.0, %v987
        %v989 = vpop.f32.mrb[0].mxu0
        %v990 = vpop.f32.mrb[0].mxu0
        %v991 = vpop.f32.mrb[0].mxu0
        %992 = vdwg.mxu0
        %993 = vst.msk [vmem:[#allocation3] sm:$0xff] %vm884, %v988
        %994 = vrot.lane.b32.xlu0 %v880, 120
        %v995 = vpop.permute.xlu0 %994
        %996 = vrot.lane.b32.xlu0 %v880, 88
        %v997 = vpop.permute.xlu0 %996
        %v999 = vsel %vm884, %v995, 0
        %v1002 = vsel %vm884, %v997, 0
        %1004 = vmatprep.subr.bf16.mxu0 0
        %1005 = vmatpush1.bf16.xpose.msra.mxu0 %v1002
        %1006 = vmatprep.subr.bf16.mxu0 0
        %1007 = vmatpush1.bf16.xpose.msra.mxu0 0
        %1008 = vmatprep.subr.bf16.mxu0 0
        %1009 = vmatpush1.bf16.xpose.msra.mxu0 0
        %1010 = vmatprep.subr.bf16.mxu0 0
        %1011 = vmatpush1.bf16.xpose.msra.mxu0 0
        %1012 = vmatprep.subr.bf16.mxu0 0
        %1013 = vmatpush1.bf16.xpose.msra.mxu0 0
        %1014 = vmatprep.subr.bf16.mxu0 0
        %1015 = vmatpush1.bf16.xpose.msra.mxu0 0
        %1016 = vmatprep.subr.bf16.mxu0 0
        %1017 = vmatpush1.bf16.xpose.msra.mxu0 0
        %1018 = vmatprep.subr.bf16.mxu0 0
        %1019 = vmatpush1.bf16.xpose.msra.mxu0 0
        %1020 = vmatprep.subr.bf16.mxu0 0
        %1021 = vmatpush1.bf16.xpose.msra.mxu0 0
        %1022 = vmatprep.subr.bf16.mxu0 0
        %1023 = vmatpush1.bf16.xpose.msra.mxu0 0
        %1024 = vmatprep.subr.bf16.mxu0 0
        %1025 = vmatpush1.bf16.xpose.msra.mxu0 0
        %1026 = vmatprep.subr.bf16.mxu0 0
        %1027 = vmatpush1.bf16.xpose.msra.mxu0 0
        %1028 = vmatprep.subr.bf16.mxu0 0
        %1029 = vmatpush1.bf16.xpose.msra.mxu0 0
        %1030 = vmatprep.subr.bf16.mxu0 0
        %1031 = vmatpush1.bf16.xpose.msra.mxu0 0
        %1032 = vmatprep.subr.bf16.mxu0 0
        %1033 = vmatpush1.bf16.xpose.msra.mxu0 0
        %1034 = vmatprep.subr.bf16.mxu0 0
        %1035 = vmatpush1.bf16.xpose.msra.mxu0 0
        %1036 = vmatprep.mubr.bf16.mxu0 0
        %1037 = vmatmul.mubr.bf16.gmra.mrb[0].mxu0 %v999
        %v1038 = vpop.f32.mrb[0].mxu0
        %v1039 = vadd.f32 0.0, %v1038
        %v1040 = vpop.f32.mrb[0].mxu0
        %v1041 = vpop.f32.mrb[0].mxu0
        %v1042 = vpop.f32.mrb[0].mxu0
        %1043 = vdwg.mxu0
        %v1044 = vmul.f32 %v1039, 0.35355338
        %v1045 = vsel %vm884, %v1044, -inf
        %1046 = vmax.xlane.f32.xlu0 %v1045
        %v1047 = vpop.xlane.xlu0 %1046
        %v1048 = vsub.f32 %v1044, %v1047
        %v1049 = vmul.f32 %v1048, 1.442695
        %v1050 = vpow.pop %v1049
        %v1051 = vsel %vm884, %v1050, 0.0
        %1052 = vadd.xlane.f32.xlu0 %v1051
        %v1053 = vpop.xlane.xlu0 %1052
        %v1054 = vrcp.pop %v1053
        %v1055 = vmul.f32 %v1050, %v1054
        %v1056 = vpack.c.bf16 %v1055, %v1055
        %1057 = vrot.lane.b32.xlu0 %v880, 56
        %v1058 = vpop.permute.xlu0 %1057
        %v1060 = vsel %vm884, %v1056, 0
        %v1063 = vsel %vm949, %v1058, 0
        %1065 = vmatprep.subr.bf16.mxu0 0
        %1066 = vmatpush1.bf16.msra.mxu0 %v1063
        %1067 = vmatprep.subr.bf16.mxu0 0
        %1068 = vmatpush1.bf16.msra.mxu0 0
        %1069 = vmatprep.subr.bf16.mxu0 0
        %1070 = vmatpush1.bf16.msra.mxu0 0
        %1071 = vmatprep.subr.bf16.mxu0 0
        %1072 = vmatpush1.bf16.msra.mxu0 0
        %1073 = vmatprep.subr.bf16.mxu0 0
        %1074 = vmatpush1.bf16.msra.mxu0 0
        %1075 = vmatprep.subr.bf16.mxu0 0
        %1076 = vmatpush1.bf16.msra.mxu0 0
        %1077 = vmatprep.subr.bf16.mxu0 0
        %1078 = vmatpush1.bf16.msra.mxu0 0
        %1079 = vmatprep.subr.bf16.mxu0 0
        %1080 = vmatpush1.bf16.msra.mxu0 0
        %1081 = vmatprep.subr.bf16.mxu0 0
        %1082 = vmatpush1.bf16.msra.mxu0 0
        %1083 = vmatprep.subr.bf16.mxu0 0
        %1084 = vmatpush1.bf16.msra.mxu0 0
        %1085 = vmatprep.subr.bf16.mxu0 0
        %1086 = vmatpush1.bf16.msra.mxu0 0
        %1087 = vmatprep.subr.bf16.mxu0 0
        %1088 = vmatpush1.bf16.msra.mxu0 0
        %1089 = vmatprep.subr.bf16.mxu0 0
        %1090 = vmatpush1.bf16.msra.mxu0 0
        %1091 = vmatprep.subr.bf16.mxu0 0
        %1092 = vmatpush1.bf16.msra.mxu0 0
        %1093 = vmatprep.subr.bf16.mxu0 0
        %1094 = vmatpush1.bf16.msra.mxu0 0
        %1095 = vmatprep.subr.bf16.mxu0 0
        %1096 = vmatpush1.bf16.msra.mxu0 0
        %1097 = vmatprep.mubr.bf16.mxu0 0
        %1098 = vmatmul.mubr.bf16.gmra.mrb[0].mxu0 %v1060
        %v1099 = vpop.f32.mrb[0].mxu0
        %v1100 = vadd.f32 0.0, %v1099
        %v1101 = vpop.f32.mrb[0].mxu0
        %v1102 = vpop.f32.mrb[0].mxu0
        %v1103 = vpop.f32.mrb[0].mxu0
        %1104 = vdwg.mxu0
        %1106 = vrot.lane.b32.xlu0 %v1100, 8
        %v1107 = vpop.permute.xlu0 %1106
        %vm1109 = vcmask 130112
        %1110 = vst.msk [vmem:[#allocation3] sm:$0xff] %vm1109, %v1107
        %1111 = vrot.lane.b32.xlu0 %v880, 112
        %v1112 = vpop.permute.xlu0 %1111
        %1113 = vrot.lane.b32.xlu0 %v880, 80
        %v1114 = vpop.permute.xlu0 %1113
        %v1116 = vsel %vm884, %v1112, 0
        %v1119 = vsel %vm884, %v1114, 0
        %1121 = vmatprep.subr.bf16.mxu0 0
        %1122 = vmatpush1.bf16.xpose.msra.mxu0 %v1119
        %1123 = vmatprep.subr.bf16.mxu0 0
        %1124 = vmatpush1.bf16.xpose.msra.mxu0 0
        %1125 = vmatprep.subr.bf16.mxu0 0
        %1126 = vmatpush1.bf16.xpose.msra.mxu0 0
        %1127 = vmatprep.subr.bf16.mxu0 0
        %1128 = vmatpush1.bf16.xpose.msra.mxu0 0
        %1129 = vmatprep.subr.bf16.mxu0 0
        %1130 = vmatpush1.bf16.xpose.msra.mxu0 0
        %1131 = vmatprep.subr.bf16.mxu0 0
        %1132 = vmatpush1.bf16.xpose.msra.mxu0 0
        %1133 = vmatprep.subr.bf16.mxu0 0
        %1134 = vmatpush1.bf16.xpose.msra.mxu0 0
        %1135 = vmatprep.subr.bf16.mxu0 0
        %1136 = vmatpush1.bf16.xpose.msra.mxu0 0
        %1137 = vmatprep.subr.bf16.mxu0 0
        %1138 = vmatpush1.bf16.xpose.msra.mxu0 0
        %1139 = vmatprep.subr.bf16.mxu0 0
        %1140 = vmatpush1.bf16.xpose.msra.mxu0 0
        %1141 = vmatprep.subr.bf16.mxu0 0
        %1142 = vmatpush1.bf16.xpose.msra.mxu0 0
        %1143 = vmatprep.subr.bf16.mxu0 0
        %1144 = vmatpush1.bf16.xpose.msra.mxu0 0
        %1145 = vmatprep.subr.bf16.mxu0 0
        %1146 = vmatpush1.bf16.xpose.msra.mxu0 0
        %1147 = vmatprep.subr.bf16.mxu0 0
        %1148 = vmatpush1.bf16.xpose.msra.mxu0 0
        %1149 = vmatprep.subr.bf16.mxu0 0
        %1150 = vmatpush1.bf16.xpose.msra.mxu0 0
        %1151 = vmatprep.subr.bf16.mxu0 0
        %1152 = vmatpush1.bf16.xpose.msra.mxu0 0
        %1153 = vmatprep.mubr.bf16.mxu0 0
        %1154 = vmatmul.mubr.bf16.gmra.mrb[0].mxu0 %v1116
        %v1155 = vpop.f32.mrb[0].mxu0
        %v1156 = vadd.f32 0.0, %v1155
        %v1157 = vpop.f32.mrb[0].mxu0
        %v1158 = vpop.f32.mrb[0].mxu0
        %v1159 = vpop.f32.mrb[0].mxu0
        %1160 = vdwg.mxu0
        %v1161 = vmul.f32 %v1156, 0.35355338
        %v1162 = vsel %vm884, %v1161, -inf
        %1163 = vmax.xlane.f32.xlu0 %v1162
        %v1164 = vpop.xlane.xlu0 %1163
        %v1165 = vsub.f32 %v1161, %v1164
        %v1166 = vmul.f32 %v1165, 1.442695
        %v1167 = vpow.pop %v1166
        %v1168 = vsel %vm884, %v1167, 0.0
        %1169 = vadd.xlane.f32.xlu0 %v1168
        %v1170 = vpop.xlane.xlu0 %1169
        %v1171 = vrcp.pop %v1170
        %v1172 = vmul.f32 %v1167, %v1171
        %v1173 = vpack.c.bf16 %v1172, %v1172
        %1174 = vrot.lane.b32.xlu0 %v880, 48
        %v1175 = vpop.permute.xlu0 %1174
        %v1177 = vsel %vm884, %v1173, 0
        %v1180 = vsel %vm949, %v1175, 0
        %1182 = vmatprep.subr.bf16.mxu0 0
        %1183 = vmatpush1.bf16.msra.mxu0 %v1180
        %1184 = vmatprep.subr.bf16.mxu0 0
        %1185 = vmatpush1.bf16.msra.mxu0 0
        %1186 = vmatprep.subr.bf16.mxu0 0
        %1187 = vmatpush1.bf16.msra.mxu0 0
        %1188 = vmatprep.subr.bf16.mxu0 0
        %1189 = vmatpush1.bf16.msra.mxu0 0
        %1190 = vmatprep.subr.bf16.mxu0 0
        %1191 = vmatpush1.bf16.msra.mxu0 0
        %1192 = vmatprep.subr.bf16.mxu0 0
        %1193 = vmatpush1.bf16.msra.mxu0 0
        %1194 = vmatprep.subr.bf16.mxu0 0
        %1195 = vmatpush1.bf16.msra.mxu0 0
        %1196 = vmatprep.subr.bf16.mxu0 0
        %1197 = vmatpush1.bf16.msra.mxu0 0
        %1198 = vmatprep.subr.bf16.mxu0 0
        %1199 = vmatpush1.bf16.msra.mxu0 0
        %1200 = vmatprep.subr.bf16.mxu0 0
        %1201 = vmatpush1.bf16.msra.mxu0 0
        %1202 = vmatprep.subr.bf16.mxu0 0
        %1203 = vmatpush1.bf16.msra.mxu0 0
        %1204 = vmatprep.subr.bf16.mxu0 0
        %1205 = vmatpush1.bf16.msra.mxu0 0
        %1206 = vmatprep.subr.bf16.mxu0 0
        %1207 = vmatpush1.bf16.msra.mxu0 0
        %1208 = vmatprep.subr.bf16.mxu0 0
        %1209 = vmatpush1.bf16.msra.mxu0 0
        %1210 = vmatprep.subr.bf16.mxu0 0
        %1211 = vmatpush1.bf16.msra.mxu0 0
        %1212 = vmatprep.subr.bf16.mxu0 0
        %1213 = vmatpush1.bf16.msra.mxu0 0
        %1214 = vmatprep.mubr.bf16.mxu0 0
        %1215 = vmatmul.mubr.bf16.gmra.mrb[0].mxu0 %v1177
        %v1216 = vpop.f32.mrb[0].mxu0
        %v1217 = vadd.f32 0.0, %v1216
        %v1218 = vpop.f32.mrb[0].mxu0
        %v1219 = vpop.f32.mrb[0].mxu0
        %v1220 = vpop.f32.mrb[0].mxu0
        %1221 = vdwg.mxu0
        %1223 = vrot.lane.b32.xlu0 %v1217, 16
        %v1224 = vpop.permute.xlu0 %1223
        %vm1226 = vcmask 195712
        %1227 = vst.msk [vmem:[#allocation3] sm:$0xff] %vm1226, %v1224
        %1228 = vrot.lane.b32.xlu0 %v880, 104
        %v1229 = vpop.permute.xlu0 %1228
        %1230 = vrot.lane.b32.xlu0 %v880, 72
        %v1231 = vpop.permute.xlu0 %1230
        %v1233 = vsel %vm884, %v1229, 0
        %v1236 = vsel %vm884, %v1231, 0
        %1238 = vmatprep.subr.bf16.mxu0 0
        %1239 = vmatpush1.bf16.xpose.msra.mxu0 %v1236
        %1240 = vmatprep.subr.bf16.mxu0 0
        %1241 = vmatpush1.bf16.xpose.msra.mxu0 0
        %1242 = vmatprep.subr.bf16.mxu0 0
        %1243 = vmatpush1.bf16.xpose.msra.mxu0 0
        %1244 = vmatprep.subr.bf16.mxu0 0
        %1245 = vmatpush1.bf16.xpose.msra.mxu0 0
        %1246 = vmatprep.subr.bf16.mxu0 0
        %1247 = vmatpush1.bf16.xpose.msra.mxu0 0
        %1248 = vmatprep.subr.bf16.mxu0 0
        %1249 = vmatpush1.bf16.xpose.msra.mxu0 0
        %1250 = vmatprep.subr.bf16.mxu0 0
        %1251 = vmatpush1.bf16.xpose.msra.mxu0 0
        %1252 = vmatprep.subr.bf16.mxu0 0
        %1253 = vmatpush1.bf16.xpose.msra.mxu0 0
        %1254 = vmatprep.subr.bf16.mxu0 0
        %1255 = vmatpush1.bf16.xpose.msra.mxu0 0
        %1256 = vmatprep.subr.bf16.mxu0 0
        %1257 = vmatpush1.bf16.xpose.msra.mxu0 0
        %1258 = vmatprep.subr.bf16.mxu0 0
        %1259 = vmatpush1.bf16.xpose.msra.mxu0 0
        %1260 = vmatprep.subr.bf16.mxu0 0
        %1261 = vmatpush1.bf16.xpose.msra.mxu0 0
        %1262 = vmatprep.subr.bf16.mxu0 0
        %1263 = vmatpush1.bf16.xpose.msra.mxu0 0
        %1264 = vmatprep.subr.bf16.mxu0 0
        %1265 = vmatpush1.bf16.xpose.msra.mxu0 0
        %1266 = vmatprep.subr.bf16.mxu0 0
        %1267 = vmatpush1.bf16.xpose.msra.mxu0 0
        %1268 = vmatprep.subr.bf16.mxu0 0
        %1269 = vmatpush1.bf16.xpose.msra.mxu0 0
        %1270 = vmatprep.mubr.bf16.mxu0 0
        %1271 = vmatmul.mubr.bf16.gmra.mrb[0].mxu0 %v1233
        %v1272 = vpop.f32.mrb[0].mxu0
        %v1273 = vadd.f32 0.0, %v1272
        %v1274 = vpop.f32.mrb[0].mxu0
        %v1275 = vpop.f32.mrb[0].mxu0
        %v1276 = vpop.f32.mrb[0].mxu0
        %1277 = vdwg.mxu0
        %v1278 = vmul.f32 %v1273, 0.35355338
        %v1279 = vsel %vm884, %v1278, -inf
        %1280 = vmax.xlane.f32.xlu0 %v1279
        %v1281 = vpop.xlane.xlu0 %1280
        %v1282 = vsub.f32 %v1278, %v1281
        %v1283 = vmul.f32 %v1282, 1.442695
        %v1284 = vpow.pop %v1283
        %v1285 = vsel %vm884, %v1284, 0.0
        %1286 = vadd.xlane.f32.xlu0 %v1285
        %v1287 = vpop.xlane.xlu0 %1286
        %v1288 = vrcp.pop %v1287
        %v1289 = vmul.f32 %v1284, %v1288
        %v1290 = vpack.c.bf16 %v1289, %v1289
        %1291 = vrot.lane.b32.xlu0 %v880, 40
        %v1292 = vpop.permute.xlu0 %1291
        %v1294 = vsel %vm884, %v1290, 0
        %v1297 = vsel %vm949, %v1292, 0
        %1299 = vmatprep.subr.bf16.mxu0 0
        %1300 = vmatpush1.bf16.msra.mxu0 %v1297
        %1301 = vmatprep.subr.bf16.mxu0 0
        %1302 = vmatpush1.bf16.msra.mxu0 0
        %1303 = vmatprep.subr.bf16.mxu0 0
        %1304 = vmatpush1.bf16.msra.mxu0 0
        %1305 = vmatprep.subr.bf16.mxu0 0
        %1306 = vmatpush1.bf16.msra.mxu0 0
        %1307 = vmatprep.subr.bf16.mxu0 0
        %1308 = vmatpush1.bf16.msra.mxu0 0
        %1309 = vmatprep.subr.bf16.mxu0 0
        %1310 = vmatpush1.bf16.msra.mxu0 0
        %1311 = vmatprep.subr.bf16.mxu0 0
        %1312 = vmatpush1.bf16.msra.mxu0 0
        %1313 = vmatprep.subr.bf16.mxu0 0
        %1314 = vmatpush1.bf16.msra.mxu0 0
        %1315 = vmatprep.subr.bf16.mxu0 0
        %1316 = vmatpush1.bf16.msra.mxu0 0
        %1317 = vmatprep.subr.bf16.mxu0 0
        %1318 = vmatpush1.bf16.msra.mxu0 0
        %1319 = vmatprep.subr.bf16.mxu0 0
        %1320 = vmatpush1.bf16.msra.mxu0 0
        %1321 = vmatprep.subr.bf16.mxu0 0
        %1322 = vmatpush1.bf16.msra.mxu0 0
        %1323 = vmatprep.subr.bf16.mxu0 0
        %1324 = vmatpush1.bf16.msra.mxu0 0
        %1325 = vmatprep.subr.bf16.mxu0 0
        %1326 = vmatpush1.bf16.msra.mxu0 0
        %1327 = vmatprep.subr.bf16.mxu0 0
        %1328 = vmatpush1.bf16.msra.mxu0 0
        %1329 = vmatprep.subr.bf16.mxu0 0
        %1330 = vmatpush1.bf16.msra.mxu0 0
        %1331 = vmatprep.mubr.bf16.mxu0 0
        %1332 = vmatmul.mubr.bf16.gmra.mrb[0].mxu0 %v1294
        %v1333 = vpop.f32.mrb[0].mxu0
        %v1334 = vadd.f32 0.0, %v1333
        %v1335 = vpop.f32.mrb[0].mxu0
        %v1336 = vpop.f32.mrb[0].mxu0
        %v1337 = vpop.f32.mrb[0].mxu0
        %1338 = vdwg.mxu0
        %1340 = vrot.lane.b32.xlu0 %v1334, 24
        %v1341 = vpop.permute.xlu0 %1340
        %vm1343 = vcmask 261312
        %1344 = vst.msk [vmem:[#allocation3] sm:$0xff] %vm1343, %v1341
        %v1345 = vld [vmem:[#allocation3] sm:$0xff]
        %v1346 = vpack.c.bf16 %v1345, %v1345
        %v1347 = vld [vmem:[%s748] sm:$0xf]
        %v1348 = vld [vmem:[%s748 + $0x4] sm:$0xf]
        %v1349 = vld [vmem:[%s748 + $0x8] sm:$0xf]
        %v1350 = vld [vmem:[%s748 + $0xc] sm:$0xf]
        %v1351 = vld [vmem:[%s751] sm:$0x1]
        %v1353 = vlaneseq
        %v1354 = vshrl.u32 %v1353, 7
        %v1355 = vsub.s32 0, %v1354
        %v1356 = vrot.slane %v1351, %v1355
        %v1362 = vunpack.c.l.b16 %v1347
        %v1363 = vunpack.c.l.b16 %v1348
        %v1364 = vunpack.c.l.b16 %v1349
        %v1365 = vunpack.c.l.b16 %v1350
        %v1366 = vpack.c.b16 %v1363, %v1362
        %v1367 = vpack.c.b16 %v1365, %v1364
        %v1371 = vsel %vm784, %v1346, 0
        %1373 = vmatprep.subr.bf16.mxu0 0
        %1374 = vmatpush1.bf16.msra.mxu0 %v1366
        %1375 = vmatprep.subr.bf16.mxu0 0
        %1376 = vmatpush1.bf16.msra.mxu0 %v1367
        %1377 = vmatprep.subr.bf16.mxu0 0
        %1378 = vmatpush1.bf16.msra.mxu0 0
        %1379 = vmatprep.subr.bf16.mxu0 0
        %1380 = vmatpush1.bf16.msra.mxu0 0
        %1381 = vmatprep.subr.bf16.mxu0 0
        %1382 = vmatpush1.bf16.msra.mxu0 0
        %1383 = vmatprep.subr.bf16.mxu0 0
        %1384 = vmatpush1.bf16.msra.mxu0 0
        %1385 = vmatprep.subr.bf16.mxu0 0
        %1386 = vmatpush1.bf16.msra.mxu0 0
        %1387 = vmatprep.subr.bf16.mxu0 0
        %1388 = vmatpush1.bf16.msra.mxu0 0
        %1389 = vmatprep.subr.bf16.mxu0 0
        %1390 = vmatpush1.bf16.msra.mxu0 0
        %1391 = vmatprep.subr.bf16.mxu0 0
        %1392 = vmatpush1.bf16.msra.mxu0 0
        %1393 = vmatprep.subr.bf16.mxu0 0
        %1394 = vmatpush1.bf16.msra.mxu0 0
        %1395 = vmatprep.subr.bf16.mxu0 0
        %1396 = vmatpush1.bf16.msra.mxu0 0
        %1397 = vmatprep.subr.bf16.mxu0 0
        %1398 = vmatpush1.bf16.msra.mxu0 0
        %1399 = vmatprep.subr.bf16.mxu0 0
        %1400 = vmatpush1.bf16.msra.mxu0 0
        %1401 = vmatprep.subr.bf16.mxu0 0
        %1402 = vmatpush1.bf16.msra.mxu0 0
        %1403 = vmatprep.subr.bf16.mxu0 0
        %1404 = vmatpush1.bf16.msra.mxu0 0
        %1405 = vmatprep.mubr.bf16.mxu0 0
        %1406 = vmatmul.mubr.bf16.gmra.mrb[0].mxu0 %v1371
        %v1407 = vpop.f32.mrb[0].mxu0
        %v1408 = vadd.f32 %v1356, %v1407
        %v1409 = vpop.f32.mrb[0].mxu0
        %v1410 = vpop.f32.mrb[0].mxu0
        %v1411 = vpop.f32.mrb[0].mxu0
        %1412 = vdwg.mxu0
        %v1413 = vadd.f32 %v1408, %v781
        %v1414 = vld [vmem:[%s754] sm:$0x1]
        %v1415 = vld [vmem:[%s757] sm:$0x1]
        %v1416 = vsel %vm784, %v1413, 0.0
        %1417 = vadd.xlane.f32.xlu0 %v1416
        %v1418 = vpop.xlane.xlu0 %1417
        %v1419 = vmul.f32 %v1418, %v788
        %v1420 = vsub.f32 %v1413, %v1419
        %v1421 = vmul.f32 %v1420, %v1420
        %v1422 = vsel %vm784, %v1421, 0.0
        %1423 = vadd.xlane.f32.xlu0 %v1422
        %v1424 = vpop.xlane.xlu0 %1423
        %v1425 = vmul.f32 %v1424, %v788
        %v1426 = vadd.f32 %v1425, 1e-06
        %v1427 = vrsqrt.pop %v1426
        %v1428 = vmul.f32 %v1420, %v1427
        %v1430 = vlaneseq
        %v1431 = vshrl.u32 %v1430, 7
        %v1432 = vsub.s32 0, %v1431
        %v1433 = vrot.slane %v1414, %v1432
        %v1435 = vmul.f32 %v1428, %v1433
        %v1437 = vlaneseq
        %v1438 = vshrl.u32 %v1437, 7
        %v1439 = vsub.s32 0, %v1438
        %v1440 = vrot.slane %v1415, %v1439
        %v1442 = vadd.f32 %v1435, %v1440
        %v1443 = vpack.c.bf16 %v1442, %v1442
        %v1444 = vld [vmem:[%s762] sm:$0xf]
        %v1445 = vld [vmem:[%s762 + $0x4] sm:$0xf]
        %v1446 = vld [vmem:[%s762 + $0x8] sm:$0xf]
        %v1447 = vld [vmem:[%s762 + $0xc] sm:$0xf]
        %v1448 = vld [vmem:[%s636] sm:$0x1]
        %v1450 = vlaneseq
        %v1451 = vshrl.u32 %v1450, 7
        %v1452 = vsub.s32 0, %v1451
        %v1453 = vrot.slane %v1448, %v1452
        %v1459 = vunpack.c.l.b16 %v1444
        %v1460 = vunpack.c.l.b16 %v1445
        %v1461 = vunpack.c.l.b16 %v1446
        %v1462 = vunpack.c.l.b16 %v1447
        %v1463 = vpack.c.b16 %v1460, %v1459
        %v1464 = vpack.c.b16 %v1462, %v1461
        %v1468 = vsel %vm784, %v1443, 0
        %1470 = vmatprep.subr.bf16.mxu0 0
        %1471 = vmatpush1.bf16.msra.mxu0 %v1463
        %1472 = vmatprep.subr.bf16.mxu0 0
        %1473 = vmatpush1.bf16.msra.mxu0 %v1464
        %1474 = vmatprep.subr.bf16.mxu0 0
        %1475 = vmatpush1.bf16.msra.mxu0 0
        %1476 = vmatprep.subr.bf16.mxu0 0
        %1477 = vmatpush1.bf16.msra.mxu0 0
        %1478 = vmatprep.subr.bf16.mxu0 0
        %1479 = vmatpush1.bf16.msra.mxu0 0
        %1480 = vmatprep.subr.bf16.mxu0 0
        %1481 = vmatpush1.bf16.msra.mxu0 0
        %1482 = vmatprep.subr.bf16.mxu0 0
        %1483 = vmatpush1.bf16.msra.mxu0 0
        %1484 = vmatprep.subr.bf16.mxu0 0
        %1485 = vmatpush1.bf16.msra.mxu0 0
        %1486 = vmatprep.subr.bf16.mxu0 0
        %1487 = vmatpush1.bf16.msra.mxu0 0
        %1488 = vmatprep.subr.bf16.mxu0 0
        %1489 = vmatpush1.bf16.msra.mxu0 0
        %1490 = vmatprep.subr.bf16.mxu0 0
        %1491 = vmatpush1.bf16.msra.mxu0 0
        %1492 = vmatprep.subr.bf16.mxu0 0
        %1493 = vmatpush1.bf16.msra.mxu0 0
        %1494 = vmatprep.subr.bf16.mxu0 0
        %1495 = vmatpush1.bf16.msra.mxu0 0
        %1496 = vmatprep.subr.bf16.mxu0 0
        %1497 = vmatpush1.bf16.msra.mxu0 0
        %1498 = vmatprep.subr.bf16.mxu0 0
        %1499 = vmatpush1.bf16.msra.mxu0 0
        %1500 = vmatprep.subr.bf16.mxu0 0
        %1501 = vmatpush1.bf16.msra.mxu0 0
        %1502 = vmatprep.mubr.bf16.mxu0 0
        %1503 = vmatmul.mubr.bf16.gmra.mrb[0].mxu0 %v1468
        %v1504 = vpop.f32.mrb[0].mxu0
        %v1505 = vadd.f32 %v1453, %v1504
        %v1506 = vpop.f32.mrb[0].mxu0
        %v1507 = vpop.f32.mrb[0].mxu0
        %v1508 = vpop.f32.mrb[0].mxu0
        %1509 = vdwg.mxu0
        %v1510 = vmul.f32 %v1505, 0.5
        %v1511 = vmul.f32 %v1505, 0.70710677
        %v1512 = verf.f32.pop %v1511
        %v1513 = vadd.f32 %v1512, 1.0
        %v1514 = vmul.f32 %v1510, %v1513
        %v1515 = vpack.c.bf16 %v1514, %v1514
        %v1516 = vld [vmem:[%s767] sm:$0xf]
        %v1517 = vld [vmem:[%s767 + $0x4] sm:$0xf]
        %v1518 = vld [vmem:[%s767 + $0x8] sm:$0xf]
        %v1519 = vld [vmem:[%s767 + $0xc] sm:$0xf]
        %v1520 = vld [vmem:[%s767 + $0x10] sm:$0xf]
        %v1521 = vld [vmem:[%s767 + $0x14] sm:$0xf]
        %v1522 = vld [vmem:[%s767 + $0x18] sm:$0xf]
        %v1523 = vld [vmem:[%s767 + $0x1c] sm:$0xf]
        %v1524 = vld [vmem:[%s770] sm:$0x1]
        %v1526 = vlaneseq
        %v1527 = vshrl.u32 %v1526, 7
        %v1528 = vsub.s32 0, %v1527
        %v1529 = vrot.slane %v1524, %v1528
        %v1539 = vunpack.c.l.b16 %v1516
        %v1540 = vunpack.c.l.b16 %v1517
        %v1541 = vunpack.c.l.b16 %v1518
        %v1542 = vunpack.c.l.b16 %v1519
        %v1543 = vunpack.c.l.b16 %v1520
        %v1544 = vunpack.c.l.b16 %v1521
        %v1545 = vunpack.c.l.b16 %v1522
        %v1546 = vunpack.c.l.b16 %v1523
        %v1547 = vpack.c.b16 %v1540, %v1539
        %v1548 = vpack.c.b16 %v1542, %v1541
        %v1549 = vpack.c.b16 %v1544, %v1543
        %v1550 = vpack.c.b16 %v1546, %v1545
        %vm1555 = vcmask 523264
        %v1557 = vsel %vm1555, %v1515, 0
        %1559 = vmatprep.subr.bf16.mxu0 0
        %1560 = vmatpush1.bf16.msra.mxu0 %v1547
        %1561 = vmatprep.subr.bf16.mxu0 0
        %1562 = vmatpush1.bf16.msra.mxu0 %v1548
        %1563 = vmatprep.subr.bf16.mxu0 0
        %1564 = vmatpush1.bf16.msra.mxu0 %v1549
        %1565 = vmatprep.subr.bf16.mxu0 0
        %1566 = vmatpush1.bf16.msra.mxu0 %v1550
        %1567 = vmatprep.subr.bf16.mxu0 0
        %1568 = vmatpush1.bf16.msra.mxu0 0
        %1569 = vmatprep.subr.bf16.mxu0 0
        %1570 = vmatpush1.bf16.msra.mxu0 0
        %1571 = vmatprep.subr.bf16.mxu0 0
        %1572 = vmatpush1.bf16.msra.mxu0 0
        %1573 = vmatprep.subr.bf16.mxu0 0
        %1574 = vmatpush1.bf16.msra.mxu0 0
        %1575 = vmatprep.subr.bf16.mxu0 0
        %1576 = vmatpush1.bf16.msra.mxu0 0
        %1577 = vmatprep.subr.bf16.mxu0 0
        %1578 = vmatpush1.bf16.msra.mxu0 0
        %1579 = vmatprep.subr.bf16.mxu0 0
        %1580 = vmatpush1.bf16.msra.mxu0 0
        %1581 = vmatprep.subr.bf16.mxu0 0
        %1582 = vmatpush1.bf16.msra.mxu0 0
        %1583 = vmatprep.subr.bf16.mxu0 0
        %1584 = vmatpush1.bf16.msra.mxu0 0
        %1585 = vmatprep.subr.bf16.mxu0 0
        %1586 = vmatpush1.bf16.msra.mxu0 0
        %1587 = vmatprep.subr.bf16.mxu0 0
        %1588 = vmatpush1.bf16.msra.mxu0 0
        %1589 = vmatprep.subr.bf16.mxu0 0
        %1590 = vmatpush1.bf16.msra.mxu0 0
        %1591 = vmatprep.mubr.bf16.mxu0 0
        %1592 = vmatmul.mubr.bf16.gmra.mrb[0].mxu0 %v1557
        %v1593 = vpop.f32.mrb[0].mxu0
        %v1594 = vadd.f32 %v1529, %v1593
        %v1595 = vpop.f32.mrb[0].mxu0
        %v1596 = vpop.f32.mrb[0].mxu0
        %v1597 = vpop.f32.mrb[0].mxu0
        %1598 = vdwg.mxu0
        %v1599 = vadd.f32 %v1413, %v1594
        %1600 = vst.msk [vmem:[#allocation2] sm:$0xff] %vm784, %v1599
        %p1601 = scmp.eq.s32.totalorder %s39, 1
        // Predicated region
        $region101: #{tpu_custom_call.1} parent=83 // pred_check
          %p1602 = pneg %p1601
        $region102: #{tpu_custom_call.1} parent=83 // pred_check_branch
          %1604 = sbr.rel (%p1602) target = $region104
        $region103: #{tpu_custom_call.1} parent=83 // pred_region
          %v1605 = vld [vmem:[%s14] sm:$0x1]
          %v1606 = vld [vmem:[%s15] sm:$0x1]
          %v1607 = vsel %vm784, %v1599, 0.0
          %1608 = vadd.xlane.f32.xlu0 %v1607
          %v1609 = vpop.xlane.xlu0 %1608
          %v1610 = vmul.f32 %v1609, %v788
          %v1611 = vsub.f32 %v1599, %v1610
          %v1612 = vmul.f32 %v1611, %v1611
          %v1613 = vsel %vm784, %v1612, 0.0
          %1614 = vadd.xlane.f32.xlu0 %v1613
          %v1615 = vpop.xlane.xlu0 %1614
          %v1616 = vmul.f32 %v1615, %v788
          %v1617 = vadd.f32 %v1616, 1e-06
          %v1618 = vrsqrt.pop %v1617
          %v1619 = vmul.f32 %v1611, %v1618
          %v1621 = vlaneseq
          %v1622 = vshrl.u32 %v1621, 7
          %v1623 = vsub.s32 0, %v1622
          %v1624 = vrot.slane %v1605, %v1623
          %v1626 = vmul.f32 %v1619, %v1624
          %v1628 = vlaneseq
          %v1629 = vshrl.u32 %v1628, 7
          %v1630 = vsub.s32 0, %v1629
          %v1631 = vrot.slane %v1606, %v1630
          %v1633 = vadd.f32 %v1626, %v1631
          %1634 = vst.msk [vmem:[%s729] sm:$0xff] %vm784, %v1633
        $region104: #{tpu_custom_call.1} parent=83 // pred_fallthru
          _
        %s1635 = sand.u32 %s455, 1
        %s1636 = scalar_lea.sflag [#allocation6], %s1635
        %s1637 = sand.u32 %s455, 1
        %s1638 = smul.addr %s1637, 8
        %s1639 = scalar_lea.vmem [#allocation10], %s1638
        // Predicated region
        $region105: #{tpu_custom_call.1} parent=83 // pred_check
          %p1640 = pneg %p465
        $region106: #{tpu_custom_call.1} parent=83 // pred_check_branch
          %1642 = sbr.rel (%p1640) target = $region108
        $region107: #{tpu_custom_call.1} parent=83 // pred_region
          %s1644 = ssub.s32 128, 128
          %1645 = vsyncadd %s1636, %s1644
          %s1646 = smul.addr %s38, 128
          %s1647 = scalar_lea.hbm %s16, %s1646
          %s1649 = sshll.u32 %s1639, 4
          %s1650 = int_to_ptr.vmem [resolvable:$true] %s1649
          %1652 = dma.vmem_to_hbm [thread:$0]  %s1650, 128, %s1647, %s1636
        $region108: #{tpu_custom_call.1} parent=83 // pred_fallthru
          _
      $region84: #{tpu_custom_call.1} parent=5 // pred_fallthru
        _
      %p1653 = scmp.le.s32.totalorder 2, %s29
      // Predicated region
      $region109: #{tpu_custom_call.1} parent=5 // pred_check
        %p1654 = pneg %p1653
      $region110: #{tpu_custom_call.1} parent=5 // pred_check_branch
        %1656 = sbr.rel (%p1654) target = $region112
      $region111: #{tpu_custom_call.1} parent=5 // pred_region
        %s1657 = ssub.s32 %s29, 2
        // Predicated region
        $region113: #{tpu_custom_call.1} parent=111 // pred_check
          %p1658 = pneg %p471
        $region114: #{tpu_custom_call.1} parent=111 // pred_check_branch
          %1660 = sbr.rel (%p1658) target = $region116
        $region115: #{tpu_custom_call.1} parent=111 // pred_region
          %s1661 = sand.u32 %s456, 1
          %s1662 = scalar_lea.sflag [#allocation6], %s1661
          %s1663 = sand.u32 %s456, 1
          %s1664 = smul.addr %s1663, 8
          %s1665 = scalar_lea.vmem [#allocation10], %s1664
          %1666 = dma.done %s1662, 128
        $region116: #{tpu_custom_call.1} parent=111 // pred_fallthru
          _
      $region112: #{tpu_custom_call.1} parent=5 // pred_fallthru
        _
    $region6: #{tpu_custom_call.1} parent=1 // loop_footer
      %s33 = sadd.s32 1, %s29
    $region7: #{tpu_custom_call.1} parent=1 // loop_footer_branch
      %28 = sbr.rel target = $region3
    $region8: #{tpu_custom_call.1} parent=1 // loop_exit
      _
    %1667 = vsyncpa [#allocation5], 1
    %s1668 = scalar_lea.sflag [#allocation5], 1
    %1669 = vsyncpa %s1668, 1
    %1670 = vsyncpa [#allocation8], 1
    %1671 = vsyncpa [#allocation6], 1
    %s1672 = scalar_lea.sflag [#allocation6], 1
    %1673 = vsyncpa %s1672, 1

</llo_original>
